<compile_context>
chip_gen: v7x
topology: tpu7x:2x2x1
jax: 0.10.0
libtpu: 0.0.40
codegen_flags: <defaults>
</compile_context>

<pallas_src>
import math
from functools import partial

import jax
import jax.numpy as jnp
from jax.experimental import pallas as pl
from jax.experimental.pallas import tpu as pltpu

# ------------------------------------------------------------------
# Tiling / dtype configuration
# ------------------------------------------------------------------
LANE = 128          # last dims padded to multiples of the 128-lane vreg width
TILE = 256          # tile cap for every grid axis: matches v6e/v7x 256x256 MXU
                    # and is 2x2 of v5e's 128x128 MXU (still 128-aligned there)
VMEM_LIMIT = 32 * 1024 * 1024   # explicit scoped-VMEM limit; tiles use <5 MiB,
                                # safe on v5e(128M)/v6e(128M)/v7x(64M)

# Operand dtype fed to the MXU.  Switching to jnp.bfloat16 roughly doubles MXU
# throughput and halves HBM traffic on v6e/v7x (f32 accumulation is kept either
# way) at the cost of ~1e-2 relative drift vs the f32 PyTorch reference, so the
# default stays f32 for numerical parity.
COMPUTE_DTYPE = jnp.float32


def _round_up(n, m):
    return ((n + m - 1) // m) * m


def _pad_dim(d):
    """Padded size: lane-dense and divisible by the tile chosen by _tile()."""
    return _round_up(d, LANE if d < TILE else TILE)


def _tile(d):
    """Tile for an already-padded dim: the full dim if small, else TILE."""
    return min(TILE, d)


def _pad2(a, rows, cols):
    r, c = a.shape
    if r == rows and c == cols:
        return a
    return jnp.pad(a, ((0, rows - r), (0, cols - c)))


# ------------------------------------------------------------------
# Generic tiled matmul:  act(A @ B + bias)
# grid = (M/tm, N/tn, K/tk); f32 VMEM accumulator; bias + activation applied
# once in the pl.when finalize (reduction axis K last / "arbitrary").
# ------------------------------------------------------------------
def _mm_bias_act_kernel(a_ref, b_ref, bias_ref, o_ref, acc_ref, *, activation):
    k = pl.program_id(2)

    @pl.when(k == 0)
    def _init():
        acc_ref[...] = jnp.zeros_like(acc_ref)

    acc_ref[...] += jnp.dot(a_ref[...], b_ref[...],
                            preferred_element_type=jnp.float32)

    @pl.when(k == pl.num_programs(2) - 1)
    def _finalize():
        out = acc_ref[...] + bias_ref[...]
        if activation == "relu":
            out = jnp.maximum(out, 0.0)
        o_ref[...] = out.astype(o_ref.dtype)


def matmul_bias_act(a, b, bias=None, activation="none"):
    M, K = a.shape
    K2, N = b.shape
    assert K == K2
    tm, tn, tk = _tile(M), _tile(N), _tile(K)
    if bias is None:
        bias2 = jnp.zeros((1, N), jnp.float32)
    else:
        bias2 = bias.reshape(1, N).astype(jnp.float32)
    return pl.pallas_call(
        partial(_mm_bias_act_kernel, activation=activation),
        out_shape=jax.ShapeDtypeStruct((M, N), jnp.float32),
        grid_spec=pltpu.PrefetchScalarGridSpec(
            num_scalar_prefetch=0,
            grid=(M // tm, N // tn, K // tk),
            in_specs=[
                pl.BlockSpec((tm, tk), lambda i, j, k: (i, k)),
                pl.BlockSpec((tk, tn), lambda i, j, k: (k, j)),
                pl.BlockSpec((1, tn), lambda i, j, k: (0, j)),
            ],
            out_specs=pl.BlockSpec((tm, tn), lambda i, j, k: (i, j)),
            scratch_shapes=[pltpu.VMEM((tm, tn), jnp.float32)],
        ),
        compiler_params=pltpu.CompilerParams(
            dimension_semantics=("parallel", "parallel", "arbitrary"),
            vmem_limit_bytes=VMEM_LIMIT,
        ),
    )(a.astype(COMPUTE_DTYPE), b.astype(COMPUTE_DTYPE), bias2)


# ------------------------------------------------------------------
# Second GCN layer of each GAE:
#   h   = relu(adj @ support + b)
#   emb = h / ||h||_2            (fused epilogue, no extra HBM pass over h)
# Hidden width H stays untiled (single j block) -- it is small for this model.
# ------------------------------------------------------------------
def _gcn2_l2_kernel(adj_ref, s_ref, bias_ref, h_ref, e_ref, acc_ref):
    k = pl.program_id(1)

    @pl.when(k == 0)
    def _init():
        acc_ref[...] = jnp.zeros_like(acc_ref)

    acc_ref[...] += jnp.dot(adj_ref[...], s_ref[...],
                            preferred_element_type=jnp.float32)

    @pl.when(k == pl.num_programs(1) - 1)
    def _finalize():
        h = jnp.maximum(acc_ref[...] + bias_ref[...], 0.0)
        h_ref[...] = h
        # Padded feature columns are exactly zero, so reducing over the padded
        # width is exact.  The tiny eps only guards the 0/0 an all-zero
        # (post-ReLU) row would otherwise produce.
        sumsq = jnp.sum(h * h, axis=-1, keepdims=True)
        e_ref[...] = h * jax.lax.rsqrt(sumsq + 1e-12)


def gcn_layer2_l2(adj, support, bias):
    M, K = adj.shape
    K2, H = support.shape
    assert K == K2
    tm, tk = _tile(M), _tile(K)
    bias2 = bias.reshape(1, H).astype(jnp.float32)
    return pl.pallas_call(
        _gcn2_l2_kernel,
        out_shape=(jax.ShapeDtypeStruct((M, H), jnp.float32),
                   jax.ShapeDtypeStruct((M, H), jnp.float32)),
        grid_spec=pltpu.PrefetchScalarGridSpec(
            num_scalar_prefetch=0,
            grid=(M // tm, K // tk),
            in_specs=[
                pl.BlockSpec((tm, tk), lambda i, k: (i, k)),
                pl.BlockSpec((tk, H), lambda i, k: (k, 0)),
                pl.BlockSpec((1, H), lambda i, k: (0, 0)),
            ],
            out_specs=[pl.BlockSpec((tm, H), lambda i, k: (i, 0)),
                       pl.BlockSpec((tm, H), lambda i, k: (i, 0))],
            scratch_shapes=[pltpu.VMEM((tm, H), jnp.float32)],
        ),
        compiler_params=pltpu.CompilerParams(
            dimension_semantics=("parallel", "arbitrary"),
            vmem_limit_bytes=VMEM_LIMIT,
        ),
    )(adj.astype(COMPUTE_DTYPE), support.astype(COMPUTE_DTYPE), bias2)


# ------------------------------------------------------------------
# GAE dot-product decoder:  sigmoid(Z @ Z.T), tiled over the (N, N) output.
# dot_general contracts the feature dim of BOTH operands -> no XLU transpose.
# ------------------------------------------------------------------
def _decode_kernel(zi_ref, zj_ref, o_ref):
    logits = jax.lax.dot_general(
        zi_ref[...], zj_ref[...],
        dimension_numbers=(((1,), (1,)), ((), ())),
        preferred_element_type=jnp.float32)
    o_ref[...] = jax.nn.sigmoid(logits)


def dot_product_decode(z):
    M, H = z.shape
    tm, tn = _tile(M), _tile(M)
    zc = z.astype(COMPUTE_DTYPE)
    return pl.pallas_call(
        _decode_kernel,
        out_shape=jax.ShapeDtypeStruct((M, M), jnp.float32),
        grid_spec=pltpu.PrefetchScalarGridSpec(
            num_scalar_prefetch=0,
            grid=(M // tm, M // tn),
            in_specs=[pl.BlockSpec((tm, H), lambda i, j: (i, 0)),
                      pl.BlockSpec((tn, H), lambda i, j: (j, 0))],
            out_specs=pl.BlockSpec((tm, tn), lambda i, j: (i, j)),
        ),
        compiler_params=pltpu.CompilerParams(
            dimension_semantics=("parallel", "parallel"),
            vmem_limit_bytes=VMEM_LIMIT,
        ),
    )(zc, zc)


# ------------------------------------------------------------------
# MLP head: Linear(no bias) -> Linear -> Linear -> LogSoftmax(dim=1)
# Tiled over rows only; the (small) weights live fully in VMEM.  Padded logit
# lanes are masked out of the LogSoftmax.
# ------------------------------------------------------------------
def _mlp_kernel(z_ref, w1_ref, w2_ref, b2_ref, w3_ref, b3_ref, o_ref, *, nclass):
    h = jnp.dot(z_ref[...], w1_ref[...], preferred_element_type=jnp.float32)
    h = jnp.dot(h.astype(w2_ref.dtype), w2_ref[...],
                preferred_element_type=jnp.float32) + b2_ref[...]
    h = jnp.dot(h.astype(w3_ref.dtype), w3_ref[...],
                preferred_element_type=jnp.float32) + b3_ref[...]
    col = jax.lax.broadcasted_iota(jnp.int32, h.shape, dimension=1)
    valid = col < nclass
    h = jnp.where(valid, h, jnp.float32(-1e30))
    m = jnp.max(h, axis=1, keepdims=True)
    s = h - m
    lse = jnp.log(jnp.sum(jnp.where(valid, jnp.exp(s), 0.0),
                          axis=1, keepdims=True))
    o_ref[...] = s - lse


def mlp_logsoftmax(z, w1, w2, b2, w3, b3, nclass):
    M, ZW = z.shape
    H = w2.shape[1]
    C = w3.shape[1]
    tm = _tile(M)
    b2r = b2.reshape(1, H).astype(jnp.float32)
    b3r = b3.reshape(1, C).astype(jnp.float32)
    cd = COMPUTE_DTYPE
    return pl.pallas_call(
        partial(_mlp_kernel, nclass=nclass),
        out_shape=jax.ShapeDtypeStruct((M, C), jnp.float32),
        grid_spec=pltpu.PrefetchScalarGridSpec(
            num_scalar_prefetch=0,
            grid=(M // tm,),
            in_specs=[
                pl.BlockSpec((tm, ZW), lambda i: (i, 0)),
                pl.BlockSpec(w1.shape, lambda i: (0, 0)),
                pl.BlockSpec(w2.shape, lambda i: (0, 0)),
                pl.BlockSpec((1, H), lambda i: (0, 0)),
                pl.BlockSpec(w3.shape, lambda i: (0, 0)),
                pl.BlockSpec((1, C), lambda i: (0, 0)),
            ],
            out_specs=pl.BlockSpec((tm, C), lambda i: (i, 0)),
        ),
        compiler_params=pltpu.CompilerParams(
            dimension_semantics=("parallel",),
            vmem_limit_bytes=VMEM_LIMIT,
        ),
    )(z.astype(cd), w1.astype(cd), w2.astype(cd), b2r, w3.astype(cd), b3r)


# ------------------------------------------------------------------
# Parameter construction (mirrors the module's __init__ shapes)
# ------------------------------------------------------------------
def _gc_params(key, in_f, out_f):
    stdv = 1.0 / math.sqrt(out_f)
    kw, kb = jax.random.split(key)
    w = jax.random.uniform(kw, (in_f, out_f), jnp.float32, -stdv, stdv)
    b = jax.random.uniform(kb, (out_f,), jnp.float32, -stdv, stdv)
    return w, b


def _lin_params(key, in_f, out_f, bias=True):
    bound = 1.0 / math.sqrt(in_f)
    kw, kb = jax.random.split(key)
    w = jax.random.uniform(kw, (in_f, out_f), jnp.float32, -bound, bound)
    b = jax.random.uniform(kb, (out_f,), jnp.float32, -bound, bound) if bias else None
    return w, b


def make_params(key, nfeat, nhid1, nhid2, nclass):
    keys = jax.random.split(key, 10)
    p = {}
    # gc1/gc2/gc3 only feed encode(), whose outputs the original forward never
    # uses -> kept for parameter-set fidelity but never evaluated (dead work).
    p["gc1"] = _gc_params(keys[0], nfeat, nhid1)
    p["gc2"] = _gc_params(keys[1], nhid1, nhid2)
    p["gc3"] = _gc_params(keys[2], nhid1, nhid2)
    p["gae1_gc1"] = _gc_params(keys[3], nfeat, nhid1)
    p["gae1_gc2"] = _gc_params(keys[4], nhid1, nhid2)
    p["gae2_gc1"] = _gc_params(keys[5], nfeat, nhid1)
    p["gae2_gc2"] = _gc_params(keys[6], nhid1, nhid2)
    # Linear weights stored as (in, out) == torch W.T
    p["mlp_w1"], _ = _lin_params(keys[7], nhid2 * 2, nhid2 * 2, bias=False)
    p["mlp_w2"], p["mlp_b2"] = _lin_params(keys[8], nhid2 * 2, nhid2)
    p["mlp_w3"], p["mlp_b3"] = _lin_params(keys[9], nhid2, nclass)
    p["logit_scale"] = jnp.asarray(math.log(1.0 / 0.07), jnp.float32)
    return p


# ------------------------------------------------------------------
# Full GClip forward (padded, jitted; padding stripped before returning)
# ------------------------------------------------------------------
def _gae_forward(x_p, adj_p, w1_p, b1_p, w2_p, b2_p):
    # GCN.forward: relu(gc1(x, adj)) -> dropout (identity, eval) -> gc2(., adj)
    # gc1/gc2 both apply ReLU internally; the outer F.relu is idempotent.
    support1 = matmul_bias_act(x_p, w1_p)                               # x @ W1
    h1 = matmul_bias_act(adj_p, support1, bias=b1_p, activation="relu")
    support2 = matmul_bias_act(h1, w2_p)                                # h1 @ W2
    h, emb = gcn_layer2_l2(adj_p, support2, b2_p)   # relu + bias + fused L2-norm
    a_pred = dot_product_decode(h)
    return h, emb, a_pred


def _gclip_forward(params, x, sadj, fadj):
    N, F = x.shape
    nhid1 = params["gae1_gc1"][0].shape[1]
    nhid2 = params["gae1_gc2"][0].shape[1]
    nclass = params["mlp_w3"].shape[1]

    # lane-dense / MXU-aligned padded sizes
    N_p, F_p = _pad_dim(N), _pad_dim(F)
    H1_p, H2_p = _pad_dim(nhid1), _pad_dim(nhid2)
    M1_p, C_p = _pad_dim(2 * nhid2), _pad_dim(nclass)

    x_p = _pad2(x, N_p, F_p)
    sadj_p = _pad2(sadj, N_p, N_p)
    fadj_p = _pad2(fadj, N_p, N_p)

    def pad_gc(name, in_p, out_p):
        w, b = params[name]
        return _pad2(w, in_p, out_p), jnp.pad(b, (0, out_p - b.shape[0]))

    g1w1, g1b1 = pad_gc("gae1_gc1", F_p, H1_p)
    g1w2, g1b2 = pad_gc("gae1_gc2", H1_p, H2_p)
    g2w1, g2b1 = pad_gc("gae2_gc1", F_p, H1_p)
    g2w2, g2b2 = pad_gc("gae2_gc2", H1_p, H2_p)

    # MLP weights: w1 rows follow the concat layout [h1 | h1-pad | h2 | h2-pad]
    w1 = params["mlp_w1"]
    w1_p = jnp.zeros((2 * H2_p, M1_p), jnp.float32)
    w1_p = w1_p.at[:nhid2, :2 * nhid2].set(w1[:nhid2])
    w1_p = w1_p.at[H2_p:H2_p + nhid2, :2 * nhid2].set(w1[nhid2:])
    w2_p = _pad2(params["mlp_w2"], M1_p, H2_p)
    mb2_p = jnp.pad(params["mlp_b2"], (0, H2_p - nhid2))
    w3_p = _pad2(params["mlp_w3"], H2_p, C_p)
    mb3_p = jnp.pad(params["mlp_b3"], (0, C_p - nclass))

    # encode(): its four outputs are never used by the original forward's
    # return value, so the six GCN layers it runs are pruned as dead work.
    h1, emb1_p, a1_p = _gae_forward(x_p, sadj_p, g1w1, g1b1, g1w2, g1b2)
    h2, emb2_p, a2_p = _gae_forward(x_p, fadj_p, g2w1, g2b1, g2w2, g2b2)

    z = jnp.concatenate((h1, h2), axis=1)            # (N_p, 2*H2_p), lane-dense
    out_p = mlp_logsoftmax(z, w1_p, w2_p, mb2_p, w3_p, mb3_p, nclass)

    logit_scale = jnp.exp(params["logit_scale"])

    # strip padding
    out = out_p[:N, :nclass]
    a_pred1 = a1_p[:N, :N]
    a_pred2 = a2_p[:N, :N]
    emb1 = emb1_p[:N, :nhid2]
    emb2 = emb2_p[:N, :nhid2]
    return out, a_pred1, a_pred2, emb1, emb2, logit_scale


gclip_forward = jax.jit(_gclip_forward)


# ------------------------------------------------------------------
if __name__ == "__main__":
    N, NFEAT, NHID1, NHID2, NCLASS = 16, 32, 32, 16, 8

    key = jax.random.PRNGKey(0)
    k_x, k_s, k_f, k_p = jax.random.split(key, 4)

    x = jax.random.normal(k_x, (N, NFEAT), jnp.float32)

    # symmetric, row-normalized random adjacencies (dense "spmm" inputs)
    def make_adj(k):
        a = jax.random.uniform(k, (N, N), jnp.float32)
        a = (a + a.T) * 0.5 + jnp.eye(N, dtype=jnp.float32)
        return a / jnp.sum(a, axis=1, keepdims=True)

    sadj = make_adj(k_s)
    fadj = make_adj(k_f)

    params = make_params(k_p, NFEAT, NHID1, NHID2, NCLASS)

    out, a_pred1, a_pred2, emb1, emb2, logit_scale = gclip_forward(
        params, x, sadj, fadj)
    jax.block_until_ready((out, a_pred1, a_pred2, emb1, emb2, logit_scale))

    assert out.shape == (N, NCLASS)
    assert a_pred1.shape == (N, N) and a_pred2.shape == (N, N)
    assert emb1.shape == (N, NHID2) and emb2.shape == (N, NHID2)
    assert bool(jnp.all(jnp.isfinite(out)))
    assert bool(jnp.all(jnp.isfinite(a_pred1))) and bool(jnp.all(jnp.isfinite(a_pred2)))
    assert bool(jnp.all(jnp.isfinite(emb1))) and bool(jnp.all(jnp.isfinite(emb2)))
    # LogSoftmax rows must exponentiate-sum to 1 over the real classes
    assert bool(jnp.allclose(jnp.sum(jnp.exp(out), axis=1), 1.0, atol=1e-4))

    print("KERNEL_OK")
</pallas_src>

<mosaic_0001>
module attributes {stable_mosaic.version = 11 : i64} {
  func.func @_mm_bias_act_kernel(%arg0: i32, %arg1: i32, %arg2: i32, %arg3: memref<128x128xf32, #tpu.memory_space<vmem>>, %arg4: memref<128x128xf32, #tpu.memory_space<vmem>>, %arg5: memref<1x128xf32, #tpu.memory_space<vmem>>, %arg6: memref<128x128xf32, #tpu.memory_space<vmem>>, %arg7: memref<128x128xf32, #tpu.memory_space<vmem>>) attributes {dimension_semantics = [#tpu.dimension_semantics<parallel>, #tpu.dimension_semantics<parallel>, #tpu.dimension_semantics<arbitrary>], iteration_bounds = array<i64: 1, 1, 1>, scalar_prefetch = 0 : i64, scratch_operands = 1 : i64, tpu.core_type = #tpu.core_type<tc>, window_params = [{transform_indices = @transform_0, window_bounds = array<i64: 128, 128>}, {transform_indices = @transform_1, window_bounds = array<i64: 128, 128>}, {transform_indices = @transform_2, window_bounds = array<i64: 1, 128>}, {transform_indices = @transform_3, window_bounds = array<i64: 128, 128>}]} {
    %c0_i32 = arith.constant 0 : i32
    %0 = arith.cmpi eq, %arg2, %c0_i32 : i32
    %1 = arith.extui %0 : i1 to i32
    %c0_i32_0 = arith.constant 0 : i32
    %2 = arith.cmpi ne, %1, %c0_i32_0 : i32
    scf.if %2 {
      %cst_10 = arith.constant 0.000000e+00 : f32
      %12 = vector.broadcast %cst_10 : f32 to vector<128x128xf32>
      %c0_11 = arith.constant 0 : index
      %c0_12 = arith.constant 0 : index
      %13 = vector.load %arg7[%c0_11, %c0_12] : memref<128x128xf32, #tpu.memory_space<vmem>>, vector<128x128xf32>
      tpu.vector_store %arg7[%c0_11, %c0_12], %12 {strides = array<i32>} : memref<128x128xf32, #tpu.memory_space<vmem>>, vector<128x128xf32>,
    } else {
    }
    %c0 = arith.constant 0 : index
    %c0_1 = arith.constant 0 : index
    %3 = vector.load %arg7[%c0, %c0_1] : memref<128x128xf32, #tpu.memory_space<vmem>>, vector<128x128xf32>
    %c0_2 = arith.constant 0 : index
    %c0_3 = arith.constant 0 : index
    %4 = vector.load %arg3[%c0_2, %c0_3] : memref<128x128xf32, #tpu.memory_space<vmem>>, vector<128x128xf32>
    %c0_4 = arith.constant 0 : index
    %c0_5 = arith.constant 0 : index
    %5 = vector.load %arg4[%c0_4, %c0_5] : memref<128x128xf32, #tpu.memory_space<vmem>>, vector<128x128xf32>
    %cst = arith.constant dense<0.000000e+00> : vector<128x128xf32>
    %6 = tpu.matmul %4, %5, %cst {dimension_numbers = #tpu.dot_dimension_numbers<[1], [0], [0], [1], [0, 0, 1, 1], [], []>} : vector<128x128xf32>, vector<128x128xf32>, vector<128x128xf32> -> vector<128x128xf32>
    %7 = arith.addf %3, %6 : vector<128x128xf32>
    %c0_6 = arith.constant 0 : index
    %c0_7 = arith.constant 0 : index
    %8 = vector.load %arg7[%c0_6, %c0_7] : memref<128x128xf32, #tpu.memory_space<vmem>>, vector<128x128xf32>
    tpu.vector_store %arg7[%c0_6, %c0_7], %7 {strides = array<i32>} : memref<128x128xf32, #tpu.memory_space<vmem>>, vector<128x128xf32>,
    %c0_i32_8 = arith.constant 0 : i32
    %9 = arith.cmpi eq, %arg2, %c0_i32_8 : i32
    %10 = arith.extui %9 : i1 to i32
    %c0_i32_9 = arith.constant 0 : i32
    %11 = arith.cmpi ne, %10, %c0_i32_9 : i32
    scf.if %11 {
      %c0_10 = arith.constant 0 : index
      %c0_11 = arith.constant 0 : index
      %12 = vector.load %arg7[%c0_10, %c0_11] : memref<128x128xf32, #tpu.memory_space<vmem>>, vector<128x128xf32>
      %c0_12 = arith.constant 0 : index
      %c0_13 = arith.constant 0 : index
      %13 = vector.load %arg5[%c0_12, %c0_13] : memref<1x128xf32, #tpu.memory_space<vmem>>, vector<1x128xf32>
      %14 = vector.broadcast %13 : vector<1x128xf32> to vector<128x128xf32>
      %15 = arith.addf %12, %14 : vector<128x128xf32>
      %cst_14 = arith.constant 0.000000e+00 : f32
      %16 = vector.broadcast %cst_14 : f32 to vector<128x128xf32>
      %17 = arith.maximumf %15, %16 : vector<128x128xf32>
      %c0_15 = arith.constant 0 : index
      %c0_16 = arith.constant 0 : index
      %18 = vector.load %arg6[%c0_15, %c0_16] : memref<128x128xf32, #tpu.memory_space<vmem>>, vector<128x128xf32>
      tpu.vector_store %arg6[%c0_15, %c0_16], %17 {strides = array<i32>} : memref<128x128xf32, #tpu.memory_space<vmem>>, vector<128x128xf32>,
    } else {
    }
    return
  }
  func.func @transform_0(%arg0: i32, %arg1: i32, %arg2: i32) -> (i32, i32) {
    %c0_i32 = arith.constant 0 : i32
    return %arg0, %arg2 : i32, i32
  }
  func.func @transform_1(%arg0: i32, %arg1: i32, %arg2: i32) -> (i32, i32) {
    %c0_i32 = arith.constant 0 : i32
    return %arg2, %arg1 : i32, i32
  }
  func.func @transform_2(%arg0: i32, %arg1: i32, %arg2: i32) -> (i32, i32) {
    %c0_i32 = arith.constant 0 : i32
    %c0_i32_0 = arith.constant 0 : i32
    return %c0_i32, %arg1 : i32, i32
  }
  func.func @transform_3(%arg0: i32, %arg1: i32, %arg2: i32) -> (i32, i32) {
    %c0_i32 = arith.constant 0 : i32
    return %arg0, %arg1 : i32, i32
  }
}

module attributes {stable_mosaic.version = 11 : i64} {
  func.func @_mm_bias_act_kernel(%arg0: i32, %arg1: i32, %arg2: i32, %arg3: memref<128x128xf32, #tpu.memory_space<vmem>>, %arg4: memref<128x128xf32, #tpu.memory_space<vmem>>, %arg5: memref<1x128xf32, #tpu.memory_space<vmem>>, %arg6: memref<128x128xf32, #tpu.memory_space<vmem>>, %arg7: memref<128x128xf32, #tpu.memory_space<vmem>>) attributes {dimension_semantics = [#tpu.dimension_semantics<parallel>, #tpu.dimension_semantics<parallel>, #tpu.dimension_semantics<arbitrary>], iteration_bounds = array<i64: 1, 1, 1>, scalar_prefetch = 0 : i64, scratch_operands = 1 : i64, tpu.core_type = #tpu.core_type<tc>, window_params = [{transform_indices = @transform_0, window_bounds = array<i64: 128, 128>}, {transform_indices = @transform_1, window_bounds = array<i64: 128, 128>}, {transform_indices = @transform_2, window_bounds = array<i64: 1, 128>}, {transform_indices = @transform_3, window_bounds = array<i64: 128, 128>}]} {
    %c0_i32 = arith.constant 0 : i32
    %0 = arith.cmpi eq, %arg2, %c0_i32 : i32
    %1 = arith.extui %0 : i1 to i32
    %c0_i32_0 = arith.constant 0 : i32
    %2 = arith.cmpi ne, %1, %c0_i32_0 : i32
    scf.if %2 {
      %cst_10 = arith.constant 0.000000e+00 : f32
      %12 = vector.broadcast %cst_10 : f32 to vector<128x128xf32>
      %c0_11 = arith.constant 0 : index
      %c0_12 = arith.constant 0 : index
      %13 = vector.load %arg7[%c0_11, %c0_12] : memref<128x128xf32, #tpu.memory_space<vmem>>, vector<128x128xf32>
      tpu.vector_store %arg7[%c0_11, %c0_12], %12 {strides = array<i32>} : memref<128x128xf32, #tpu.memory_space<vmem>>, vector<128x128xf32>,
    } else {
    }
    %c0 = arith.constant 0 : index
    %c0_1 = arith.constant 0 : index
    %3 = vector.load %arg7[%c0, %c0_1] : memref<128x128xf32, #tpu.memory_space<vmem>>, vector<128x128xf32>
    %c0_2 = arith.constant 0 : index
    %c0_3 = arith.constant 0 : index
    %4 = vector.load %arg3[%c0_2, %c0_3] : memref<128x128xf32, #tpu.memory_space<vmem>>, vector<128x128xf32>
    %c0_4 = arith.constant 0 : index
    %c0_5 = arith.constant 0 : index
    %5 = vector.load %arg4[%c0_4, %c0_5] : memref<128x128xf32, #tpu.memory_space<vmem>>, vector<128x128xf32>
    %cst = arith.constant dense<0.000000e+00> : vector<128x128xf32>
    %6 = tpu.matmul %4, %5, %cst {dimension_numbers = #tpu.dot_dimension_numbers<[1], [0], [0], [1], [0, 0, 1, 1], [], []>} : vector<128x128xf32>, vector<128x128xf32>, vector<128x128xf32> -> vector<128x128xf32>
    %7 = arith.addf %3, %6 : vector<128x128xf32>
    %c0_6 = arith.constant 0 : index
    %c0_7 = arith.constant 0 : index
    %8 = vector.load %arg7[%c0_6, %c0_7] : memref<128x128xf32, #tpu.memory_space<vmem>>, vector<128x128xf32>
    tpu.vector_store %arg7[%c0_6, %c0_7], %7 {strides = array<i32>} : memref<128x128xf32, #tpu.memory_space<vmem>>, vector<128x128xf32>,
    %c0_i32_8 = arith.constant 0 : i32
    %9 = arith.cmpi eq, %arg2, %c0_i32_8 : i32
    %10 = arith.extui %9 : i1 to i32
    %c0_i32_9 = arith.constant 0 : i32
    %11 = arith.cmpi ne, %10, %c0_i32_9 : i32
    scf.if %11 {
      %c0_10 = arith.constant 0 : index
      %c0_11 = arith.constant 0 : index
      %12 = vector.load %arg7[%c0_10, %c0_11] : memref<128x128xf32, #tpu.memory_space<vmem>>, vector<128x128xf32>
      %c0_12 = arith.constant 0 : index
      %c0_13 = arith.constant 0 : index
      %13 = vector.load %arg5[%c0_12, %c0_13] : memref<1x128xf32, #tpu.memory_space<vmem>>, vector<1x128xf32>
      %14 = vector.broadcast %13 : vector<1x128xf32> to vector<128x128xf32>
      %15 = arith.addf %12, %14 : vector<128x128xf32>
      %c0_14 = arith.constant 0 : index
      %c0_15 = arith.constant 0 : index
      %16 = vector.load %arg6[%c0_14, %c0_15] : memref<128x128xf32, #tpu.memory_space<vmem>>, vector<128x128xf32>
      tpu.vector_store %arg6[%c0_14, %c0_15], %15 {strides = array<i32>} : memref<128x128xf32, #tpu.memory_space<vmem>>, vector<128x128xf32>,
    } else {
    }
    return
  }
  func.func @transform_0(%arg0: i32, %arg1: i32, %arg2: i32) -> (i32, i32) {
    %c0_i32 = arith.constant 0 : i32
    return %arg0, %arg2 : i32, i32
  }
  func.func @transform_1(%arg0: i32, %arg1: i32, %arg2: i32) -> (i32, i32) {
    %c0_i32 = arith.constant 0 : i32
    return %arg2, %arg1 : i32, i32
  }
  func.func @transform_2(%arg0: i32, %arg1: i32, %arg2: i32) -> (i32, i32) {
    %c0_i32 = arith.constant 0 : i32
    %c0_i32_0 = arith.constant 0 : i32
    return %c0_i32, %arg1 : i32, i32
  }
  func.func @transform_3(%arg0: i32, %arg1: i32, %arg2: i32) -> (i32, i32) {
    %c0_i32 = arith.constant 0 : i32
    return %arg0, %arg1 : i32, i32
  }
}

module attributes {stable_mosaic.version = 11 : i64} {
  func.func @_gcn2_l2_kernel(%arg0: i32, %arg1: i32, %arg2: memref<128x128xf32, #tpu.memory_space<vmem>>, %arg3: memref<128x128xf32, #tpu.memory_space<vmem>>, %arg4: memref<1x128xf32, #tpu.memory_space<vmem>>, %arg5: memref<128x128xf32, #tpu.memory_space<vmem>>, %arg6: memref<128x128xf32, #tpu.memory_space<vmem>>, %arg7: memref<128x128xf32, #tpu.memory_space<vmem>>) attributes {dimension_semantics = [#tpu.dimension_semantics<parallel>, #tpu.dimension_semantics<arbitrary>], iteration_bounds = array<i64: 1, 1>, scalar_prefetch = 0 : i64, scratch_operands = 1 : i64, tpu.core_type = #tpu.core_type<tc>, window_params = [{transform_indices = @transform_0, window_bounds = array<i64: 128, 128>}, {transform_indices = @transform_1, window_bounds = array<i64: 128, 128>}, {pipeline_mode = #tpu.pipeline_mode<synchronous>, transform_indices = @transform_2, window_bounds = array<i64: 1, 128>}, {transform_indices = @transform_3, window_bounds = array<i64: 128, 128>}, {transform_indices = @transform_4, window_bounds = array<i64: 128, 128>}]} {
    %c0_i32 = arith.constant 0 : i32
    %0 = arith.cmpi eq, %arg1, %c0_i32 : i32
    %1 = arith.extui %0 : i1 to i32
    %c0_i32_0 = arith.constant 0 : i32
    %2 = arith.cmpi ne, %1, %c0_i32_0 : i32
    scf.if %2 {
      %cst_10 = arith.constant 0.000000e+00 : f32
      %12 = vector.broadcast %cst_10 : f32 to vector<128x128xf32>
      %c0_11 = arith.constant 0 : index
      %c0_12 = arith.constant 0 : index
      %13 = vector.load %arg7[%c0_11, %c0_12] : memref<128x128xf32, #tpu.memory_space<vmem>>, vector<128x128xf32>
      tpu.vector_store %arg7[%c0_11, %c0_12], %12 {strides = array<i32>} : memref<128x128xf32, #tpu.memory_space<vmem>>, vector<128x128xf32>,
    } else {
    }
    %c0 = arith.constant 0 : index
    %c0_1 = arith.constant 0 : index
    %3 = vector.load %arg7[%c0, %c0_1] : memref<128x128xf32, #tpu.memory_space<vmem>>, vector<128x128xf32>
    %c0_2 = arith.constant 0 : index
    %c0_3 = arith.constant 0 : index
    %4 = vector.load %arg2[%c0_2, %c0_3] : memref<128x128xf32, #tpu.memory_space<vmem>>, vector<128x128xf32>
    %c0_4 = arith.constant 0 : index
    %c0_5 = arith.constant 0 : index
    %5 = vector.load %arg3[%c0_4, %c0_5] : memref<128x128xf32, #tpu.memory_space<vmem>>, vector<128x128xf32>
    %cst = arith.constant dense<0.000000e+00> : vector<128x128xf32>
    %6 = tpu.matmul %4, %5, %cst {dimension_numbers = #tpu.dot_dimension_numbers<[1], [0], [0], [1], [0, 0, 1, 1], [], []>} : vector<128x128xf32>, vector<128x128xf32>, vector<128x128xf32> -> vector<128x128xf32>
    %7 = arith.addf %3, %6 : vector<128x128xf32>
    %c0_6 = arith.constant 0 : index
    %c0_7 = arith.constant 0 : index
    %8 = vector.load %arg7[%c0_6, %c0_7] : memref<128x128xf32, #tpu.memory_space<vmem>>, vector<128x128xf32>
    tpu.vector_store %arg7[%c0_6, %c0_7], %7 {strides = array<i32>} : memref<128x128xf32, #tpu.memory_space<vmem>>, vector<128x128xf32>,
    %c0_i32_8 = arith.constant 0 : i32
    %9 = arith.cmpi eq, %arg1, %c0_i32_8 : i32
    %10 = arith.extui %9 : i1 to i32
    %c0_i32_9 = arith.constant 0 : i32
    %11 = arith.cmpi ne, %10, %c0_i32_9 : i32
    scf.if %11 {
      %c0_10 = arith.constant 0 : index
      %c0_11 = arith.constant 0 : index
      %12 = vector.load %arg7[%c0_10, %c0_11] : memref<128x128xf32, #tpu.memory_space<vmem>>, vector<128x128xf32>
      %c0_12 = arith.constant 0 : index
      %c0_13 = arith.constant 0 : index
      %13 = vector.load %arg4[%c0_12, %c0_13] : memref<1x128xf32, #tpu.memory_space<vmem>>, vector<1x128xf32>
      %14 = vector.broadcast %13 : vector<1x128xf32> to vector<128x128xf32>
      %15 = arith.addf %12, %14 : vector<128x128xf32>
      %cst_14 = arith.constant 0.000000e+00 : f32
      %16 = vector.broadcast %cst_14 : f32 to vector<128x128xf32>
      %17 = arith.maximumf %15, %16 : vector<128x128xf32>
      %c0_15 = arith.constant 0 : index
      %c0_16 = arith.constant 0 : index
      %18 = vector.load %arg5[%c0_15, %c0_16] : memref<128x128xf32, #tpu.memory_space<vmem>>, vector<128x128xf32>
      tpu.vector_store %arg5[%c0_15, %c0_16], %17 {strides = array<i32>} : memref<128x128xf32, #tpu.memory_space<vmem>>, vector<128x128xf32>,
      %19 = arith.mulf %17, %17 : vector<128x128xf32>
      %cst_17 = arith.constant dense<0.000000e+00> : vector<128xf32>
      %20 = vector.multi_reduction <add>, %19, %cst_17 [1] : vector<128x128xf32> to vector<128xf32>
      %21 = vector.shape_cast %20 : vector<128xf32> to vector<128x1xf32>
      %cst_18 = arith.constant 9.99999996E-13 : f32
      %22 = vector.broadcast %cst_18 : f32 to vector<128x1xf32>
      %23 = arith.addf %21, %22 : vector<128x1xf32>
      %24 = math.rsqrt %23 : vector<128x1xf32>
      %25 = vector.broadcast %24 : vector<128x1xf32> to vector<128x128xf32>
      %26 = arith.mulf %17, %25 : vector<128x128xf32>
      %c0_19 = arith.constant 0 : index
      %c0_20 = arith.constant 0 : index
      %27 = vector.load %arg6[%c0_19, %c0_20] : memref<128x128xf32, #tpu.memory_space<vmem>>, vector<128x128xf32>
      tpu.vector_store %arg6[%c0_19, %c0_20], %26 {strides = array<i32>} : memref<128x128xf32, #tpu.memory_space<vmem>>, vector<128x128xf32>,
    } else {
    }
    return
  }
  func.func @transform_0(%arg0: i32, %arg1: i32) -> (i32, i32) {
    %c0_i32 = arith.constant 0 : i32
    return %arg0, %arg1 : i32, i32
  }
  func.func @transform_1(%arg0: i32, %arg1: i32) -> (i32, i32) {
    %c0_i32 = arith.constant 0 : i32
    %c0_i32_0 = arith.constant 0 : i32
    return %arg1, %c0_i32 : i32, i32
  }
  func.func @transform_2(%arg0: i32, %arg1: i32) -> (i32, i32) {
    %c0_i32 = arith.constant 0 : i32
    %c0_i32_0 = arith.constant 0 : i32
    %c0_i32_1 = arith.constant 0 : i32
    return %c0_i32, %c0_i32_0 : i32, i32
  }
  func.func @transform_3(%arg0: i32, %arg1: i32) -> (i32, i32) {
    %c0_i32 = arith.constant 0 : i32
    %c0_i32_0 = arith.constant 0 : i32
    return %arg0, %c0_i32 : i32, i32
  }
  func.func @transform_4(%arg0: i32, %arg1: i32) -> (i32, i32) {
    %c0_i32 = arith.constant 0 : i32
    %c0_i32_0 = arith.constant 0 : i32
    return %arg0, %c0_i32 : i32, i32
  }
}

module attributes {stable_mosaic.version = 11 : i64} {
  func.func @_decode_kernel(%arg0: i32, %arg1: i32, %arg2: memref<128x128xf32, #tpu.memory_space<vmem>>, %arg3: memref<128x128xf32, #tpu.memory_space<vmem>>, %arg4: memref<128x128xf32, #tpu.memory_space<vmem>>) attributes {dimension_semantics = [#tpu.dimension_semantics<parallel>, #tpu.dimension_semantics<parallel>], iteration_bounds = array<i64: 1, 1>, scalar_prefetch = 0 : i64, scratch_operands = 0 : i64, tpu.core_type = #tpu.core_type<tc>, window_params = [{transform_indices = @transform_0, window_bounds = array<i64: 128, 128>}, {transform_indices = @transform_1, window_bounds = array<i64: 128, 128>}, {transform_indices = @transform_2, window_bounds = array<i64: 128, 128>}]} {
    %c0 = arith.constant 0 : index
    %c0_0 = arith.constant 0 : index
    %0 = vector.load %arg2[%c0, %c0_0] : memref<128x128xf32, #tpu.memory_space<vmem>>, vector<128x128xf32>
    %c0_1 = arith.constant 0 : index
    %c0_2 = arith.constant 0 : index
    %1 = vector.load %arg3[%c0_1, %c0_2] : memref<128x128xf32, #tpu.memory_space<vmem>>, vector<128x128xf32>
    %cst = arith.constant dense<0.000000e+00> : vector<128x128xf32>
    %2 = tpu.matmul %0, %1, %cst {dimension_numbers = #tpu.dot_dimension_numbers<[1], [1], [0], [0], [0, 0, 1, 0], [], []>} : vector<128x128xf32>, vector<128x128xf32>, vector<128x128xf32> -> vector<128x128xf32>
    %3 = arith.negf %2 : vector<128x128xf32>
    %4 = math.exp %3 : vector<128x128xf32>
    %cst_3 = arith.constant 1.000000e+00 : f32
    %5 = vector.broadcast %cst_3 : f32 to vector<128x128xf32>
    %6 = arith.addf %5, %4 : vector<128x128xf32>
    %7 = arith.divf %5, %6 : vector<128x128xf32>
    %c0_4 = arith.constant 0 : index
    %c0_5 = arith.constant 0 : index
    %8 = vector.load %arg4[%c0_4, %c0_5] : memref<128x128xf32, #tpu.memory_space<vmem>>, vector<128x128xf32>
    tpu.vector_store %arg4[%c0_4, %c0_5], %7 {strides = array<i32>} : memref<128x128xf32, #tpu.memory_space<vmem>>, vector<128x128xf32>,
    return
  }
  func.func @transform_0(%arg0: i32, %arg1: i32) -> (i32, i32) {
    %c0_i32 = arith.constant 0 : i32
    %c0_i32_0 = arith.constant 0 : i32
    return %arg0, %c0_i32 : i32, i32
  }
  func.func @transform_1(%arg0: i32, %arg1: i32) -> (i32, i32) {
    %c0_i32 = arith.constant 0 : i32
    %c0_i32_0 = arith.constant 0 : i32
    return %arg1, %c0_i32 : i32, i32
  }
  func.func @transform_2(%arg0: i32, %arg1: i32) -> (i32, i32) {
    %c0_i32 = arith.constant 0 : i32
    return %arg0, %arg1 : i32, i32
  }
}

module attributes {stable_mosaic.version = 11 : i64} {
  func.func @_mlp_kernel(%arg0: i32, %arg1: memref<128x256xf32, #tpu.memory_space<vmem>>, %arg2: memref<256x128xf32, #tpu.memory_space<vmem>>, %arg3: memref<128x128xf32, #tpu.memory_space<vmem>>, %arg4: memref<1x128xf32, #tpu.memory_space<vmem>>, %arg5: memref<128x128xf32, #tpu.memory_space<vmem>>, %arg6: memref<1x128xf32, #tpu.memory_space<vmem>>, %arg7: memref<128x128xf32, #tpu.memory_space<vmem>>) attributes {dimension_semantics = [#tpu.dimension_semantics<parallel>], iteration_bounds = array<i64: 1>, scalar_prefetch = 0 : i64, scratch_operands = 0 : i64, tpu.core_type = #tpu.core_type<tc>, window_params = [{transform_indices = @transform_0, window_bounds = array<i64: 128, 256>}, {pipeline_mode = #tpu.pipeline_mode<synchronous>, transform_indices = @transform_1, window_bounds = array<i64: 256, 128>}, {pipeline_mode = #tpu.pipeline_mode<synchronous>, transform_indices = @transform_2, window_bounds = array<i64: 128, 128>}, {pipeline_mode = #tpu.pipeline_mode<synchronous>, transform_indices = @transform_3, window_bounds = array<i64: 1, 128>}, {pipeline_mode = #tpu.pipeline_mode<synchronous>, transform_indices = @transform_4, window_bounds = array<i64: 128, 128>}, {pipeline_mode = #tpu.pipeline_mode<synchronous>, transform_indices = @transform_5, window_bounds = array<i64: 1, 128>}, {transform_indices = @transform_6, window_bounds = array<i64: 128, 128>}]} {
    %c0 = arith.constant 0 : index
    %c0_0 = arith.constant 0 : index
    %0 = vector.load %arg1[%c0, %c0_0] : memref<128x256xf32, #tpu.memory_space<vmem>>, vector<128x256xf32>
    %c0_1 = arith.constant 0 : index
    %c0_2 = arith.constant 0 : index
    %1 = vector.load %arg2[%c0_1, %c0_2] : memref<256x128xf32, #tpu.memory_space<vmem>>, vector<256x128xf32>
    %cst = arith.constant dense<0.000000e+00> : vector<128x128xf32>
    %2 = tpu.matmul %0, %1, %cst {dimension_numbers = #tpu.dot_dimension_numbers<[1], [0], [0], [1], [0, 0, 1, 1], [], []>} : vector<128x256xf32>, vector<256x128xf32>, vector<128x128xf32> -> vector<128x128xf32>
    %c0_3 = arith.constant 0 : index
    %c0_4 = arith.constant 0 : index
    %3 = vector.load %arg3[%c0_3, %c0_4] : memref<128x128xf32, #tpu.memory_space<vmem>>, vector<128x128xf32>
    %cst_5 = arith.constant dense<0.000000e+00> : vector<128x128xf32>
    %4 = tpu.matmul %2, %3, %cst_5 {dimension_numbers = #tpu.dot_dimension_numbers<[1], [0], [0], [1], [0, 0, 1, 1], [], []>} : vector<128x128xf32>, vector<128x128xf32>, vector<128x128xf32> -> vector<128x128xf32>
    %c0_6 = arith.constant 0 : index
    %c0_7 = arith.constant 0 : index
    %5 = vector.load %arg4[%c0_6, %c0_7] : memref<1x128xf32, #tpu.memory_space<vmem>>, vector<1x128xf32>
    %6 = vector.broadcast %5 : vector<1x128xf32> to vector<128x128xf32>
    %7 = arith.addf %4, %6 : vector<128x128xf32>
    %c0_8 = arith.constant 0 : index
    %c0_9 = arith.constant 0 : index
    %8 = vector.load %arg5[%c0_8, %c0_9] : memref<128x128xf32, #tpu.memory_space<vmem>>, vector<128x128xf32>
    %cst_10 = arith.constant dense<0.000000e+00> : vector<128x128xf32>
    %9 = tpu.matmul %7, %8, %cst_10 {dimension_numbers = #tpu.dot_dimension_numbers<[1], [0], [0], [1], [0, 0, 1, 1], [], []>} : vector<128x128xf32>, vector<128x128xf32>, vector<128x128xf32> -> vector<128x128xf32>
    %c0_11 = arith.constant 0 : index
    %c0_12 = arith.constant 0 : index
    %10 = vector.load %arg6[%c0_11, %c0_12] : memref<1x128xf32, #tpu.memory_space<vmem>>, vector<1x128xf32>
    %11 = vector.broadcast %10 : vector<1x128xf32> to vector<128x128xf32>
    %12 = arith.addf %9, %11 : vector<128x128xf32>
    %13 = tpu.iota {dimensions = array<i32: 1>} : vector<128x128xi32>
    %c8_i32 = arith.constant 8 : i32
    %14 = vector.broadcast %c8_i32 : i32 to vector<128x128xi32>
    %15 = arith.cmpi slt, %13, %14 : vector<128x128xi32>
    %cst_13 = arith.constant -1.000000e+30 : f32
    %16 = vector.broadcast %cst_13 : f32 to vector<128x128xf32>
    %17 = arith.select %15, %12, %16 : vector<128x128xi1>, vector<128x128xf32>
    %cst_14 = arith.constant dense<0xFF800000> : vector<128xf32>
    %18 = vector.multi_reduction <maximumf>, %17, %cst_14 [1] : vector<128x128xf32> to vector<128xf32>
    %19 = vector.shape_cast %18 : vector<128xf32> to vector<128x1xf32>
    %20 = vector.broadcast %19 : vector<128x1xf32> to vector<128x128xf32>
    %21 = arith.subf %17, %20 : vector<128x128xf32>
    %22 = math.exp %21 : vector<128x128xf32>
    %cst_15 = arith.constant 0.000000e+00 : f32
    %23 = vector.broadcast %cst_15 : f32 to vector<128x128xf32>
    %24 = arith.select %15, %22, %23 : vector<128x128xi1>, vector<128x128xf32>
    %cst_16 = arith.constant dense<0.000000e+00> : vector<128xf32>
    %25 = vector.multi_reduction <add>, %24, %cst_16 [1] : vector<128x128xf32> to vector<128xf32>
    %26 = vector.shape_cast %25 : vector<128xf32> to vector<128x1xf32>
    %27 = math.log %26 : vector<128x1xf32>
    %28 = vector.broadcast %27 : vector<128x1xf32> to vector<128x128xf32>
    %29 = arith.subf %21, %28 : vector<128x128xf32>
    %c0_17 = arith.constant 0 : index
    %c0_18 = arith.constant 0 : index
    %30 = vector.load %arg7[%c0_17, %c0_18] : memref<128x128xf32, #tpu.memory_space<vmem>>, vector<128x128xf32>
    tpu.vector_store %arg7[%c0_17, %c0_18], %29 {strides = array<i32>} : memref<128x128xf32, #tpu.memory_space<vmem>>, vector<128x128xf32>,
    return
  }
  func.func @transform_0(%arg0: i32) -> (i32, i32) {
    %c0_i32 = arith.constant 0 : i32
    %c0_i32_0 = arith.constant 0 : i32
    return %arg0, %c0_i32 : i32, i32
  }
  func.func @transform_1(%arg0: i32) -> (i32, i32) {
    %c0_i32 = arith.constant 0 : i32
    %c0_i32_0 = arith.constant 0 : i32
    %c0_i32_1 = arith.constant 0 : i32
    return %c0_i32, %c0_i32_0 : i32, i32
  }
  func.func @transform_2(%arg0: i32) -> (i32, i32) {
    %c0_i32 = arith.constant 0 : i32
    %c0_i32_0 = arith.constant 0 : i32
    %c0_i32_1 = arith.constant 0 : i32
    return %c0_i32, %c0_i32_0 : i32, i32
  }
  func.func @transform_3(%arg0: i32) -> (i32, i32) {
    %c0_i32 = arith.constant 0 : i32
    %c0_i32_0 = arith.constant 0 : i32
    %c0_i32_1 = arith.constant 0 : i32
    return %c0_i32, %c0_i32_0 : i32, i32
  }
  func.func @transform_4(%arg0: i32) -> (i32, i32) {
    %c0_i32 = arith.constant 0 : i32
    %c0_i32_0 = arith.constant 0 : i32
    %c0_i32_1 = arith.constant 0 : i32
    return %c0_i32, %c0_i32_0 : i32, i32
  }
  func.func @transform_5(%arg0: i32) -> (i32, i32) {
    %c0_i32 = arith.constant 0 : i32
    %c0_i32_0 = arith.constant 0 : i32
    %c0_i32_1 = arith.constant 0 : i32
    return %c0_i32, %c0_i32_0 : i32, i32
  }
  func.func @transform_6(%arg0: i32) -> (i32, i32) {
    %c0_i32 = arith.constant 0 : i32
    %c0_i32_0 = arith.constant 0 : i32
    return %arg0, %c0_i32 : i32, i32
  }
}

</mosaic_0001>

<llo_original>
// kernel: _gclip_forward.15
$region0: #{_gclip_forward.15}
  #allocation0 [shape = 'u32[]', space=smem, size = 0x4, offset = 0x4, fixed_abs, tag = 'smem constant byte address 0x4 - core index']
  #allocation1 [shape = 'u32[144,128]{1,0:T(1,128)}', space=vmem, size = 0x12000, scoped, tag = 'internal scratch']
  %s0 = inlined_call_operand.vmem [shape: f32[128,128], index: 0, kind: input, shape index: {}, may-alias: {0,1}]
  %s1 = inlined_call_operand.vmem [shape: f32[128,128], index: 1, kind: input, shape index: {}, may-alias: {0,1}]
  %s2 = inlined_call_operand.vmem [shape: f32[128,128], index: 2, kind: output, shape index: {}]
  %s3 = sld [smem:[#allocation0]]
  $region18: #{_gclip_forward.15} parent=0
    _
  %s5 = ssub.s32 1, %s3
  %s6 = scalar_select 0, %s5, %s3
  // Predicated region
  $region2: #{_gclip_forward.15} parent=0 // pred_check
    _
  $region3: #{_gclip_forward.15} parent=0 // pred_check_branch
    %8 = sbr.rel (0) target = $region5
  $region4: #{_gclip_forward.15} parent=0 // pred_region
    _
  $region5: #{_gclip_forward.15} parent=0 // pred_fallthru
    _
  // Predicated region
  $region6: #{_gclip_forward.15} parent=0 // pred_check
    _
  $region7: #{_gclip_forward.15} parent=0 // pred_check_branch
    %10 = sbr.rel (0) target = $region9
  $region8: #{_gclip_forward.15} parent=0 // pred_region
    _
  $region9: #{_gclip_forward.15} parent=0 // pred_fallthru
    _
  %v11 = vld [vmem:[%s0] sm:$0xff]
  %v12 = vld [vmem:[%s0 + $0x8] sm:$0xff]
  %v13 = vld [vmem:[%s0 + $0x10] sm:$0xff]
  %v14 = vld [vmem:[%s0 + $0x18] sm:$0xff]
  %v15 = vld [vmem:[%s0 + $0x20] sm:$0xff]
  %v16 = vld [vmem:[%s0 + $0x28] sm:$0xff]
  %v17 = vld [vmem:[%s0 + $0x30] sm:$0xff]
  %v18 = vld [vmem:[%s0 + $0x38] sm:$0xff]
  %v19 = vld [vmem:[%s0 + $0x40] sm:$0xff]
  %v20 = vld [vmem:[%s0 + $0x48] sm:$0xff]
  %v21 = vld [vmem:[%s0 + $0x50] sm:$0xff]
  %v22 = vld [vmem:[%s0 + $0x58] sm:$0xff]
  %v23 = vld [vmem:[%s0 + $0x60] sm:$0xff]
  %v24 = vld [vmem:[%s0 + $0x68] sm:$0xff]
  %v25 = vld [vmem:[%s0 + $0x70] sm:$0xff]
  %v26 = vld [vmem:[%s0 + $0x78] sm:$0xff]
  %v27 = vld [vmem:[%s1] sm:$0xff]
  %v28 = vld [vmem:[%s1 + $0x8] sm:$0xff]
  %v29 = vld [vmem:[%s1 + $0x10] sm:$0xff]
  %v30 = vld [vmem:[%s1 + $0x18] sm:$0xff]
  %v31 = vld [vmem:[%s1 + $0x20] sm:$0xff]
  %v32 = vld [vmem:[%s1 + $0x28] sm:$0xff]
  %v33 = vld [vmem:[%s1 + $0x30] sm:$0xff]
  %v34 = vld [vmem:[%s1 + $0x38] sm:$0xff]
  %v35 = vld [vmem:[%s1 + $0x40] sm:$0xff]
  %v36 = vld [vmem:[%s1 + $0x48] sm:$0xff]
  %v37 = vld [vmem:[%s1 + $0x50] sm:$0xff]
  %v38 = vld [vmem:[%s1 + $0x58] sm:$0xff]
  %v39 = vld [vmem:[%s1 + $0x60] sm:$0xff]
  %v40 = vld [vmem:[%s1 + $0x68] sm:$0xff]
  %v41 = vld [vmem:[%s1 + $0x70] sm:$0xff]
  %v42 = vld [vmem:[%s1 + $0x78] sm:$0xff]
  %43 = vmatprep.subr.mxu0 0.0
  %44 = vmatpush1.xpose.msra.mxu0 %v27
  %45 = vmatprep.subr.mxu0 0.0
  %46 = vmatpush1.xpose.msra.mxu0 %v28
  %47 = vmatprep.subr.mxu0 0.0
  %48 = vmatpush1.xpose.msra.mxu0 %v29
  %49 = vmatprep.subr.mxu0 0.0
  %50 = vmatpush1.xpose.msra.mxu0 %v30
  %51 = vmatprep.subr.mxu0 0.0
  %52 = vmatpush1.xpose.msra.mxu0 %v31
  %53 = vmatprep.subr.mxu0 0.0
  %54 = vmatpush1.xpose.msra.mxu0 %v32
  %55 = vmatprep.subr.mxu0 0.0
  %56 = vmatpush1.xpose.msra.mxu0 %v33
  %57 = vmatprep.subr.mxu0 0.0
  %58 = vmatpush1.xpose.msra.mxu0 %v34
  %59 = vmatprep.subr.mxu0 0.0
  %60 = vmatpush1.xpose.msra.mxu0 %v35
  %61 = vmatprep.subr.mxu0 0.0
  %62 = vmatpush1.xpose.msra.mxu0 %v36
  %63 = vmatprep.subr.mxu0 0.0
  %64 = vmatpush1.xpose.msra.mxu0 %v37
  %65 = vmatprep.subr.mxu0 0.0
  %66 = vmatpush1.xpose.msra.mxu0 %v38
  %67 = vmatprep.subr.mxu0 0.0
  %68 = vmatpush1.xpose.msra.mxu0 %v39
  %69 = vmatprep.subr.mxu0 0.0
  %70 = vmatpush1.xpose.msra.mxu0 %v40
  %71 = vmatprep.subr.mxu0 0.0
  %72 = vmatpush1.xpose.msra.mxu0 %v41
  %73 = vmatprep.subr.mxu0 0.0
  %74 = vmatpush1.xpose.msra.mxu0 %v42
  %75 = vmatprep.subr.mxu0 0.0
  %76 = vmatpush1.xpose.msra.mxu0 0.0
  %77 = vmatprep.subr.mxu0 0.0
  %78 = vmatpush1.xpose.msra.mxu0 0.0
  %79 = vmatprep.subr.mxu0 0.0
  %80 = vmatpush1.xpose.msra.mxu0 0.0
  %81 = vmatprep.subr.mxu0 0.0
  %82 = vmatpush1.xpose.msra.mxu0 0.0
  %83 = vmatprep.subr.mxu0 0.0
  %84 = vmatpush1.xpose.msra.mxu0 0.0
  %85 = vmatprep.subr.mxu0 0.0
  %86 = vmatpush1.xpose.msra.mxu0 0.0
  %87 = vmatprep.subr.mxu0 0.0
  %88 = vmatpush1.xpose.msra.mxu0 0.0
  %89 = vmatprep.subr.mxu0 0.0
  %90 = vmatpush1.xpose.msra.mxu0 0.0
  %91 = vmatprep.subr.mxu0 0.0
  %92 = vmatpush1.xpose.msra.mxu0 0.0
  %93 = vmatprep.subr.mxu0 0.0
  %94 = vmatpush1.xpose.msra.mxu0 0.0
  %95 = vmatprep.subr.mxu0 0.0
  %96 = vmatpush1.xpose.msra.mxu0 0.0
  %97 = vmatprep.subr.mxu0 0.0
  %98 = vmatpush1.xpose.msra.mxu0 0.0
  %99 = vmatprep.subr.mxu0 0.0
  %100 = vmatpush1.xpose.msra.mxu0 0.0
  %101 = vmatprep.subr.mxu0 0.0
  %102 = vmatpush1.xpose.msra.mxu0 0.0
  %103 = vmatprep.subr.mxu0 0.0
  %104 = vmatpush1.xpose.msra.mxu0 0.0
  %105 = vmatprep.subr.mxu0 0.0
  %106 = vmatpush1.xpose.msra.mxu0 0.0
  %107 = vmatprep.mubr.f32.mxu0 0.0
  %108 = vmatmul.mubr.f32.gmra.mrb[0].mxu0 %v11
  %v109 = vpop.f32.mrb[0].mxu0
  %v110 = vadd.f32 0.0, %v109
  %v111 = vpop.f32.mrb[0].mxu0
  %112 = vmatprep.mubr.f32.mxu0 0.0
  %113 = vmatmul.mubr.f32.gmra.mrb[0].mxu0 %v12
  %v114 = vpop.f32.mrb[0].mxu0
  %v115 = vadd.f32 0.0, %v114
  %v116 = vpop.f32.mrb[0].mxu0
  %117 = vmatprep.mubr.f32.mxu0 0.0
  %118 = vmatmul.mubr.f32.gmra.mrb[0].mxu0 %v13
  %v119 = vpop.f32.mrb[0].mxu0
  %v120 = vadd.f32 0.0, %v119
  %v121 = vpop.f32.mrb[0].mxu0
  %122 = vmatprep.mubr.f32.mxu0 0.0
  %123 = vmatmul.mubr.f32.gmra.mrb[0].mxu0 %v14
  %v124 = vpop.f32.mrb[0].mxu0
  %v125 = vadd.f32 0.0, %v124
  %v126 = vpop.f32.mrb[0].mxu0
  %127 = vmatprep.mubr.f32.mxu0 0.0
  %128 = vmatmul.mubr.f32.gmra.mrb[0].mxu0 %v15
  %v129 = vpop.f32.mrb[0].mxu0
  %v130 = vadd.f32 0.0, %v129
  %v131 = vpop.f32.mrb[0].mxu0
  %132 = vmatprep.mubr.f32.mxu0 0.0
  %133 = vmatmul.mubr.f32.gmra.mrb[0].mxu0 %v16
  %v134 = vpop.f32.mrb[0].mxu0
  %v135 = vadd.f32 0.0, %v134
  %v136 = vpop.f32.mrb[0].mxu0
  %137 = vmatprep.mubr.f32.mxu0 0.0
  %138 = vmatmul.mubr.f32.gmra.mrb[0].mxu0 %v17
  %v139 = vpop.f32.mrb[0].mxu0
  %v140 = vadd.f32 0.0, %v139
  %v141 = vpop.f32.mrb[0].mxu0
  %142 = vmatprep.mubr.f32.mxu0 0.0
  %143 = vmatmul.mubr.f32.gmra.mrb[0].mxu0 %v18
  %v144 = vpop.f32.mrb[0].mxu0
  %v145 = vadd.f32 0.0, %v144
  %v146 = vpop.f32.mrb[0].mxu0
  %147 = vmatprep.mubr.f32.mxu0 0.0
  %148 = vmatmul.mubr.f32.gmra.mrb[0].mxu0 %v19
  %v149 = vpop.f32.mrb[0].mxu0
  %v150 = vadd.f32 0.0, %v149
  %v151 = vpop.f32.mrb[0].mxu0
  %152 = vmatprep.mubr.f32.mxu0 0.0
  %153 = vmatmul.mubr.f32.gmra.mrb[0].mxu0 %v20
  %v154 = vpop.f32.mrb[0].mxu0
  %v155 = vadd.f32 0.0, %v154
  %v156 = vpop.f32.mrb[0].mxu0
  %157 = vmatprep.mubr.f32.mxu0 0.0
  %158 = vmatmul.mubr.f32.gmra.mrb[0].mxu0 %v21
  %v159 = vpop.f32.mrb[0].mxu0
  %v160 = vadd.f32 0.0, %v159
  %v161 = vpop.f32.mrb[0].mxu0
  %162 = vmatprep.mubr.f32.mxu0 0.0
  %163 = vmatmul.mubr.f32.gmra.mrb[0].mxu0 %v22
  %v164 = vpop.f32.mrb[0].mxu0
  %v165 = vadd.f32 0.0, %v164
  %v166 = vpop.f32.mrb[0].mxu0
  %167 = vmatprep.mubr.f32.mxu0 0.0
  %168 = vmatmul.mubr.f32.gmra.mrb[0].mxu0 %v23
  %v169 = vpop.f32.mrb[0].mxu0
  %v170 = vadd.f32 0.0, %v169
  %v171 = vpop.f32.mrb[0].mxu0
  %172 = vmatprep.mubr.f32.mxu0 0.0
  %173 = vmatmul.mubr.f32.gmra.mrb[0].mxu0 %v24
  %v174 = vpop.f32.mrb[0].mxu0
  %v175 = vadd.f32 0.0, %v174
  %v176 = vpop.f32.mrb[0].mxu0
  %177 = vmatprep.mubr.f32.mxu0 0.0
  %178 = vmatmul.mubr.f32.gmra.mrb[0].mxu0 %v25
  %v179 = vpop.f32.mrb[0].mxu0
  %v180 = vadd.f32 0.0, %v179
  %v181 = vpop.f32.mrb[0].mxu0
  %182 = vmatprep.mubr.f32.mxu0 0.0
  %183 = vmatmul.mubr.f32.gmra.mrb[0].mxu0 %v26
  %v184 = vpop.f32.mrb[0].mxu0
  %v185 = vadd.f32 0.0, %v184
  %v186 = vpop.f32.mrb[0].mxu0
  %187 = vdwg.mxu0
  %v188 = vxor.u32 %v110, 2147483648
  %v189 = vxor.u32 %v115, 2147483648
  %v190 = vxor.u32 %v120, 2147483648
  %v191 = vxor.u32 %v125, 2147483648
  %v192 = vxor.u32 %v130, 2147483648
  %v193 = vxor.u32 %v135, 2147483648
  %v194 = vxor.u32 %v140, 2147483648
  %v195 = vxor.u32 %v145, 2147483648
  %v196 = vxor.u32 %v150, 2147483648
  %v197 = vxor.u32 %v155, 2147483648
  %v198 = vxor.u32 %v160, 2147483648
  %v199 = vxor.u32 %v165, 2147483648
  %v200 = vxor.u32 %v170, 2147483648
  %v201 = vxor.u32 %v175, 2147483648
  %v202 = vxor.u32 %v180, 2147483648
  %v203 = vxor.u32 %v185, 2147483648
  %v204 = vmul.f32 %v188, 1.442695
  %v205 = vpow.pop %v204
  %v206 = vmul.f32 %v189, 1.442695
  %v207 = vpow.pop %v206
  %v208 = vmul.f32 %v190, 1.442695
  %v209 = vpow.pop %v208
  %v210 = vmul.f32 %v191, 1.442695
  %v211 = vpow.pop %v210
  %v212 = vmul.f32 %v192, 1.442695
  %v213 = vpow.pop %v212
  %v214 = vmul.f32 %v193, 1.442695
  %v215 = vpow.pop %v214
  %v216 = vmul.f32 %v194, 1.442695
  %v217 = vpow.pop %v216
  %v218 = vmul.f32 %v195, 1.442695
  %v219 = vpow.pop %v218
  %v220 = vmul.f32 %v196, 1.442695
  %v221 = vpow.pop %v220
  %v222 = vmul.f32 %v197, 1.442695
  %v223 = vpow.pop %v222
  %v224 = vmul.f32 %v198, 1.442695
  %v225 = vpow.pop %v224
  %v226 = vmul.f32 %v199, 1.442695
  %v227 = vpow.pop %v226
  %v228 = vmul.f32 %v200, 1.442695
  %v229 = vpow.pop %v228
  %v230 = vmul.f32 %v201, 1.442695
  %v231 = vpow.pop %v230
  %v232 = vmul.f32 %v202, 1.442695
  %v233 = vpow.pop %v232
  %v234 = vmul.f32 %v203, 1.442695
  %v235 = vpow.pop %v234
  %v236 = vadd.f32 %v205, 1.0
  %v237 = vadd.f32 %v207, 1.0
  %v238 = vadd.f32 %v209, 1.0
  %v239 = vadd.f32 %v211, 1.0
  %v240 = vadd.f32 %v213, 1.0
  %v241 = vadd.f32 %v215, 1.0
  %v242 = vadd.f32 %v217, 1.0
  %v243 = vadd.f32 %v219, 1.0
  %v244 = vadd.f32 %v221, 1.0
  %v245 = vadd.f32 %v223, 1.0
  %v246 = vadd.f32 %v225, 1.0
  %v247 = vadd.f32 %v227, 1.0
  %v248 = vadd.f32 %v229, 1.0
  %v249 = vadd.f32 %v231, 1.0
  %v250 = vadd.f32 %v233, 1.0
  %v251 = vadd.f32 %v235, 1.0
  %v252 = vrcp.pop %v236
  %v253 = vmul.f32 1.0, %v252
  %v254 = vrcp.pop %v237
  %v255 = vmul.f32 1.0, %v254
  %v256 = vrcp.pop %v238
  %v257 = vmul.f32 1.0, %v256
  %v258 = vrcp.pop %v239
  %v259 = vmul.f32 1.0, %v258
  %v260 = vrcp.pop %v240
  %v261 = vmul.f32 1.0, %v260
  %v262 = vrcp.pop %v241
  %v263 = vmul.f32 1.0, %v262
  %v264 = vrcp.pop %v242
  %v265 = vmul.f32 1.0, %v264
  %v266 = vrcp.pop %v243
  %v267 = vmul.f32 1.0, %v266
  %v268 = vrcp.pop %v244
  %v269 = vmul.f32 1.0, %v268
  %v270 = vrcp.pop %v245
  %v271 = vmul.f32 1.0, %v270
  %v272 = vrcp.pop %v246
  %v273 = vmul.f32 1.0, %v272
  %v274 = vrcp.pop %v247
  %v275 = vmul.f32 1.0, %v274
  %v276 = vrcp.pop %v248
  %v277 = vmul.f32 1.0, %v276
  %v278 = vrcp.pop %v249
  %v279 = vmul.f32 1.0, %v278
  %v280 = vrcp.pop %v250
  %v281 = vmul.f32 1.0, %v280
  %v282 = vrcp.pop %v251
  %v283 = vmul.f32 1.0, %v282
  %284 = vst [vmem:[%s2] sm:$0xff] %v253
  %285 = vst [vmem:[%s2 + $0x8] sm:$0xff] %v255
  %286 = vst [vmem:[%s2 + $0x10] sm:$0xff] %v257
  %287 = vst [vmem:[%s2 + $0x18] sm:$0xff] %v259
  %288 = vst [vmem:[%s2 + $0x20] sm:$0xff] %v261
  %289 = vst [vmem:[%s2 + $0x28] sm:$0xff] %v263
  %290 = vst [vmem:[%s2 + $0x30] sm:$0xff] %v265
  %291 = vst [vmem:[%s2 + $0x38] sm:$0xff] %v267
  %292 = vst [vmem:[%s2 + $0x40] sm:$0xff] %v269
  %293 = vst [vmem:[%s2 + $0x48] sm:$0xff] %v271
  %294 = vst [vmem:[%s2 + $0x50] sm:$0xff] %v273
  %295 = vst [vmem:[%s2 + $0x58] sm:$0xff] %v275
  %296 = vst [vmem:[%s2 + $0x60] sm:$0xff] %v277
  %297 = vst [vmem:[%s2 + $0x68] sm:$0xff] %v279
  %298 = vst [vmem:[%s2 + $0x70] sm:$0xff] %v281
  %299 = vst [vmem:[%s2 + $0x78] sm:$0xff] %v283
  // Predicated region
  $region10: #{_gclip_forward.15} parent=0 // pred_check
    _
  $region11: #{_gclip_forward.15} parent=0 // pred_check_branch
    %301 = sbr.rel (0) target = $region13
  $region12: #{_gclip_forward.15} parent=0 // pred_region
    _
  $region13: #{_gclip_forward.15} parent=0 // pred_fallthru
    _
  // Predicated region
  $region14: #{_gclip_forward.15} parent=0 // pred_check
    _
  $region15: #{_gclip_forward.15} parent=0 // pred_check_branch
    %303 = sbr.rel (0) target = $region17
  $region16: #{_gclip_forward.15} parent=0 // pred_region
    _
  $region17: #{_gclip_forward.15} parent=0 // pred_fallthru
    _

// kernel: _gclip_forward.12
$region0: #{_gclip_forward.12}
  #allocation0 [shape = 'u32[]', space=smem, size = 0x4, offset = 0x4, fixed_abs, tag = 'smem constant byte address 0x4 - core index']
  #allocation1 [shape = 'u32[144,128]{1,0:T(1,128)}', space=vmem, size = 0x12000, scoped, tag = 'internal scratch']
  #allocation2 [shape = 'f32[128,128]{1,0:T(8,128)}', space=vmem, size = 0x10000, scoped, tag = 'scratch operand']
  %s0 = inlined_call_operand.vmem [shape: f32[128,128], index: 0, kind: input, shape index: {}]
  %s1 = inlined_call_operand.vmem [shape: f32[128,128], index: 1, kind: input, shape index: {}]
  %s2 = inlined_call_operand.vmem [shape: f32[1,128], index: 2, kind: input, shape index: {}]
  %s3 = inlined_call_operand.vmem [shape: f32[128,128], index: 3, kind: output, shape index: {}]
  %s4 = sld [smem:[#allocation0]]
  $region30: #{_gclip_forward.12} parent=0
    _
  %s6 = ssub.s32 1, %s4
  %s7 = scalar_select 0, %s6, %s4
  // Predicated region
  $region2: #{_gclip_forward.12} parent=0 // pred_check
    _
  $region3: #{_gclip_forward.12} parent=0 // pred_check_branch
    %9 = sbr.rel (0) target = $region5
  $region4: #{_gclip_forward.12} parent=0 // pred_region
    _
  $region5: #{_gclip_forward.12} parent=0 // pred_fallthru
    _
  // Predicated region
  $region6: #{_gclip_forward.12} parent=0 // pred_check
    _
  $region7: #{_gclip_forward.12} parent=0 // pred_check_branch
    %11 = sbr.rel (0) target = $region9
  $region8: #{_gclip_forward.12} parent=0 // pred_region
    _
  $region9: #{_gclip_forward.12} parent=0 // pred_fallthru
    _
  // Predicated region
  $region10: #{_gclip_forward.12} parent=0 // pred_check
    _
  $region11: #{_gclip_forward.12} parent=0 // pred_check_branch
    %13 = sbr.rel (0) target = $region13
  $region12: #{_gclip_forward.12} parent=0 // pred_region
    _
  $region13: #{_gclip_forward.12} parent=0 // pred_fallthru
    _
  %p14 = scmp.eq.s32.totalorder 0, 0
  // Predicated region
  $region14: #{_gclip_forward.12} parent=0 // pred_check
    %p15 = pneg %p14
  $region15: #{_gclip_forward.12} parent=0 // pred_check_branch
    %17 = sbr.rel (%p15) target = $region17
  $region16: #{_gclip_forward.12} parent=0 // pred_region
    %18 = vst [vmem:[#allocation2] sm:$0xff] 0.0
    %19 = vst [vmem:[#allocation2 + $0x8] sm:$0xff] 0.0
    %20 = vst [vmem:[#allocation2 + $0x10] sm:$0xff] 0.0
    %21 = vst [vmem:[#allocation2 + $0x18] sm:$0xff] 0.0
    %22 = vst [vmem:[#allocation2 + $0x20] sm:$0xff] 0.0
    %23 = vst [vmem:[#allocation2 + $0x28] sm:$0xff] 0.0
    %24 = vst [vmem:[#allocation2 + $0x30] sm:$0xff] 0.0
    %25 = vst [vmem:[#allocation2 + $0x38] sm:$0xff] 0.0
    %26 = vst [vmem:[#allocation2 + $0x40] sm:$0xff] 0.0
    %27 = vst [vmem:[#allocation2 + $0x48] sm:$0xff] 0.0
    %28 = vst [vmem:[#allocation2 + $0x50] sm:$0xff] 0.0
    %29 = vst [vmem:[#allocation2 + $0x58] sm:$0xff] 0.0
    %30 = vst [vmem:[#allocation2 + $0x60] sm:$0xff] 0.0
    %31 = vst [vmem:[#allocation2 + $0x68] sm:$0xff] 0.0
    %32 = vst [vmem:[#allocation2 + $0x70] sm:$0xff] 0.0
    %33 = vst [vmem:[#allocation2 + $0x78] sm:$0xff] 0.0
  $region17: #{_gclip_forward.12} parent=0 // pred_fallthru
    _
  %v34 = vld [vmem:[#allocation2] sm:$0xff]
  %v35 = vld [vmem:[#allocation2 + $0x8] sm:$0xff]
  %v36 = vld [vmem:[#allocation2 + $0x10] sm:$0xff]
  %v37 = vld [vmem:[#allocation2 + $0x18] sm:$0xff]
  %v38 = vld [vmem:[#allocation2 + $0x20] sm:$0xff]
  %v39 = vld [vmem:[#allocation2 + $0x28] sm:$0xff]
  %v40 = vld [vmem:[#allocation2 + $0x30] sm:$0xff]
  %v41 = vld [vmem:[#allocation2 + $0x38] sm:$0xff]
  %v42 = vld [vmem:[#allocation2 + $0x40] sm:$0xff]
  %v43 = vld [vmem:[#allocation2 + $0x48] sm:$0xff]
  %v44 = vld [vmem:[#allocation2 + $0x50] sm:$0xff]
  %v45 = vld [vmem:[#allocation2 + $0x58] sm:$0xff]
  %v46 = vld [vmem:[#allocation2 + $0x60] sm:$0xff]
  %v47 = vld [vmem:[#allocation2 + $0x68] sm:$0xff]
  %v48 = vld [vmem:[#allocation2 + $0x70] sm:$0xff]
  %v49 = vld [vmem:[#allocation2 + $0x78] sm:$0xff]
  %v50 = vld [vmem:[%s0] sm:$0xff]
  %v51 = vld [vmem:[%s0 + $0x8] sm:$0xff]
  %v52 = vld [vmem:[%s0 + $0x10] sm:$0xff]
  %v53 = vld [vmem:[%s0 + $0x18] sm:$0xff]
  %v54 = vld [vmem:[%s0 + $0x20] sm:$0xff]
  %v55 = vld [vmem:[%s0 + $0x28] sm:$0xff]
  %v56 = vld [vmem:[%s0 + $0x30] sm:$0xff]
  %v57 = vld [vmem:[%s0 + $0x38] sm:$0xff]
  %v58 = vld [vmem:[%s0 + $0x40] sm:$0xff]
  %v59 = vld [vmem:[%s0 + $0x48] sm:$0xff]
  %v60 = vld [vmem:[%s0 + $0x50] sm:$0xff]
  %v61 = vld [vmem:[%s0 + $0x58] sm:$0xff]
  %v62 = vld [vmem:[%s0 + $0x60] sm:$0xff]
  %v63 = vld [vmem:[%s0 + $0x68] sm:$0xff]
  %v64 = vld [vmem:[%s0 + $0x70] sm:$0xff]
  %v65 = vld [vmem:[%s0 + $0x78] sm:$0xff]
  %v66 = vld [vmem:[%s1] sm:$0xff]
  %v67 = vld [vmem:[%s1 + $0x8] sm:$0xff]
  %v68 = vld [vmem:[%s1 + $0x10] sm:$0xff]
  %v69 = vld [vmem:[%s1 + $0x18] sm:$0xff]
  %v70 = vld [vmem:[%s1 + $0x20] sm:$0xff]
  %v71 = vld [vmem:[%s1 + $0x28] sm:$0xff]
  %v72 = vld [vmem:[%s1 + $0x30] sm:$0xff]
  %v73 = vld [vmem:[%s1 + $0x38] sm:$0xff]
  %v74 = vld [vmem:[%s1 + $0x40] sm:$0xff]
  %v75 = vld [vmem:[%s1 + $0x48] sm:$0xff]
  %v76 = vld [vmem:[%s1 + $0x50] sm:$0xff]
  %v77 = vld [vmem:[%s1 + $0x58] sm:$0xff]
  %v78 = vld [vmem:[%s1 + $0x60] sm:$0xff]
  %v79 = vld [vmem:[%s1 + $0x68] sm:$0xff]
  %v80 = vld [vmem:[%s1 + $0x70] sm:$0xff]
  %v81 = vld [vmem:[%s1 + $0x78] sm:$0xff]
  %82 = vmatprep.subr.mxu0 0.0
  %83 = vmatpush1.msra.mxu0 %v66
  %84 = vmatprep.subr.mxu0 0.0
  %85 = vmatpush1.msra.mxu0 %v67
  %86 = vmatprep.subr.mxu0 0.0
  %87 = vmatpush1.msra.mxu0 %v68
  %88 = vmatprep.subr.mxu0 0.0
  %89 = vmatpush1.msra.mxu0 %v69
  %90 = vmatprep.subr.mxu0 0.0
  %91 = vmatpush1.msra.mxu0 %v70
  %92 = vmatprep.subr.mxu0 0.0
  %93 = vmatpush1.msra.mxu0 %v71
  %94 = vmatprep.subr.mxu0 0.0
  %95 = vmatpush1.msra.mxu0 %v72
  %96 = vmatprep.subr.mxu0 0.0
  %97 = vmatpush1.msra.mxu0 %v73
  %98 = vmatprep.subr.mxu0 0.0
  %99 = vmatpush1.msra.mxu0 %v74
  %100 = vmatprep.subr.mxu0 0.0
  %101 = vmatpush1.msra.mxu0 %v75
  %102 = vmatprep.subr.mxu0 0.0
  %103 = vmatpush1.msra.mxu0 %v76
  %104 = vmatprep.subr.mxu0 0.0
  %105 = vmatpush1.msra.mxu0 %v77
  %106 = vmatprep.subr.mxu0 0.0
  %107 = vmatpush1.msra.mxu0 %v78
  %108 = vmatprep.subr.mxu0 0.0
  %109 = vmatpush1.msra.mxu0 %v79
  %110 = vmatprep.subr.mxu0 0.0
  %111 = vmatpush1.msra.mxu0 %v80
  %112 = vmatprep.subr.mxu0 0.0
  %113 = vmatpush1.msra.mxu0 %v81
  %114 = vmatprep.subr.mxu0 0.0
  %115 = vmatpush1.msra.mxu0 0.0
  %116 = vmatprep.subr.mxu0 0.0
  %117 = vmatpush1.msra.mxu0 0.0
  %118 = vmatprep.subr.mxu0 0.0
  %119 = vmatpush1.msra.mxu0 0.0
  %120 = vmatprep.subr.mxu0 0.0
  %121 = vmatpush1.msra.mxu0 0.0
  %122 = vmatprep.subr.mxu0 0.0
  %123 = vmatpush1.msra.mxu0 0.0
  %124 = vmatprep.subr.mxu0 0.0
  %125 = vmatpush1.msra.mxu0 0.0
  %126 = vmatprep.subr.mxu0 0.0
  %127 = vmatpush1.msra.mxu0 0.0
  %128 = vmatprep.subr.mxu0 0.0
  %129 = vmatpush1.msra.mxu0 0.0
  %130 = vmatprep.subr.mxu0 0.0
  %131 = vmatpush1.msra.mxu0 0.0
  %132 = vmatprep.subr.mxu0 0.0
  %133 = vmatpush1.msra.mxu0 0.0
  %134 = vmatprep.subr.mxu0 0.0
  %135 = vmatpush1.msra.mxu0 0.0
  %136 = vmatprep.subr.mxu0 0.0
  %137 = vmatpush1.msra.mxu0 0.0
  %138 = vmatprep.subr.mxu0 0.0
  %139 = vmatpush1.msra.mxu0 0.0
  %140 = vmatprep.subr.mxu0 0.0
  %141 = vmatpush1.msra.mxu0 0.0
  %142 = vmatprep.subr.mxu0 0.0
  %143 = vmatpush1.msra.mxu0 0.0
  %144 = vmatprep.subr.mxu0 0.0
  %145 = vmatpush1.msra.mxu0 0.0
  %146 = vmatprep.mubr.f32.mxu0 0.0
  %147 = vmatmul.mubr.f32.gmra.mrb[0].mxu0 %v50
  %v148 = vpop.f32.mrb[0].mxu0
  %v149 = vadd.f32 0.0, %v148
  %v150 = vpop.f32.mrb[0].mxu0
  %151 = vmatprep.mubr.f32.mxu0 0.0
  %152 = vmatmul.mubr.f32.gmra.mrb[0].mxu0 %v51
  %v153 = vpop.f32.mrb[0].mxu0
  %v154 = vadd.f32 0.0, %v153
  %v155 = vpop.f32.mrb[0].mxu0
  %156 = vmatprep.mubr.f32.mxu0 0.0
  %157 = vmatmul.mubr.f32.gmra.mrb[0].mxu0 %v52
  %v158 = vpop.f32.mrb[0].mxu0
  %v159 = vadd.f32 0.0, %v158
  %v160 = vpop.f32.mrb[0].mxu0
  %161 = vmatprep.mubr.f32.mxu0 0.0
  %162 = vmatmul.mubr.f32.gmra.mrb[0].mxu0 %v53
  %v163 = vpop.f32.mrb[0].mxu0
  %v164 = vadd.f32 0.0, %v163
  %v165 = vpop.f32.mrb[0].mxu0
  %166 = vmatprep.mubr.f32.mxu0 0.0
  %167 = vmatmul.mubr.f32.gmra.mrb[0].mxu0 %v54
  %v168 = vpop.f32.mrb[0].mxu0
  %v169 = vadd.f32 0.0, %v168
  %v170 = vpop.f32.mrb[0].mxu0
  %171 = vmatprep.mubr.f32.mxu0 0.0
  %172 = vmatmul.mubr.f32.gmra.mrb[0].mxu0 %v55
  %v173 = vpop.f32.mrb[0].mxu0
  %v174 = vadd.f32 0.0, %v173
  %v175 = vpop.f32.mrb[0].mxu0
  %176 = vmatprep.mubr.f32.mxu0 0.0
  %177 = vmatmul.mubr.f32.gmra.mrb[0].mxu0 %v56
  %v178 = vpop.f32.mrb[0].mxu0
  %v179 = vadd.f32 0.0, %v178
  %v180 = vpop.f32.mrb[0].mxu0
  %181 = vmatprep.mubr.f32.mxu0 0.0
  %182 = vmatmul.mubr.f32.gmra.mrb[0].mxu0 %v57
  %v183 = vpop.f32.mrb[0].mxu0
  %v184 = vadd.f32 0.0, %v183
  %v185 = vpop.f32.mrb[0].mxu0
  %186 = vmatprep.mubr.f32.mxu0 0.0
  %187 = vmatmul.mubr.f32.gmra.mrb[0].mxu0 %v58
  %v188 = vpop.f32.mrb[0].mxu0
  %v189 = vadd.f32 0.0, %v188
  %v190 = vpop.f32.mrb[0].mxu0
  %191 = vmatprep.mubr.f32.mxu0 0.0
  %192 = vmatmul.mubr.f32.gmra.mrb[0].mxu0 %v59
  %v193 = vpop.f32.mrb[0].mxu0
  %v194 = vadd.f32 0.0, %v193
  %v195 = vpop.f32.mrb[0].mxu0
  %196 = vmatprep.mubr.f32.mxu0 0.0
  %197 = vmatmul.mubr.f32.gmra.mrb[0].mxu0 %v60
  %v198 = vpop.f32.mrb[0].mxu0
  %v199 = vadd.f32 0.0, %v198
  %v200 = vpop.f32.mrb[0].mxu0
  %201 = vmatprep.mubr.f32.mxu0 0.0
  %202 = vmatmul.mubr.f32.gmra.mrb[0].mxu0 %v61
  %v203 = vpop.f32.mrb[0].mxu0
  %v204 = vadd.f32 0.0, %v203
  %v205 = vpop.f32.mrb[0].mxu0
  %206 = vmatprep.mubr.f32.mxu0 0.0
  %207 = vmatmul.mubr.f32.gmra.mrb[0].mxu0 %v62
  %v208 = vpop.f32.mrb[0].mxu0
  %v209 = vadd.f32 0.0, %v208
  %v210 = vpop.f32.mrb[0].mxu0
  %211 = vmatprep.mubr.f32.mxu0 0.0
  %212 = vmatmul.mubr.f32.gmra.mrb[0].mxu0 %v63
  %v213 = vpop.f32.mrb[0].mxu0
  %v214 = vadd.f32 0.0, %v213
  %v215 = vpop.f32.mrb[0].mxu0
  %216 = vmatprep.mubr.f32.mxu0 0.0
  %217 = vmatmul.mubr.f32.gmra.mrb[0].mxu0 %v64
  %v218 = vpop.f32.mrb[0].mxu0
  %v219 = vadd.f32 0.0, %v218
  %v220 = vpop.f32.mrb[0].mxu0
  %221 = vmatprep.mubr.f32.mxu0 0.0
  %222 = vmatmul.mubr.f32.gmra.mrb[0].mxu0 %v65
  %v223 = vpop.f32.mrb[0].mxu0
  %v224 = vadd.f32 0.0, %v223
  %v225 = vpop.f32.mrb[0].mxu0
  %226 = vdwg.mxu0
  %v227 = vadd.f32 %v34, %v149
  %v228 = vadd.f32 %v35, %v154
  %v229 = vadd.f32 %v36, %v159
  %v230 = vadd.f32 %v37, %v164
  %v231 = vadd.f32 %v38, %v169
  %v232 = vadd.f32 %v39, %v174
  %v233 = vadd.f32 %v40, %v179
  %v234 = vadd.f32 %v41, %v184
  %v235 = vadd.f32 %v42, %v189
  %v236 = vadd.f32 %v43, %v194
  %v237 = vadd.f32 %v44, %v199
  %v238 = vadd.f32 %v45, %v204
  %v239 = vadd.f32 %v46, %v209
  %v240 = vadd.f32 %v47, %v214
  %v241 = vadd.f32 %v48, %v219
  %v242 = vadd.f32 %v49, %v224
  %243 = vst [vmem:[#allocation2] sm:$0xff] %v227
  %244 = vst [vmem:[#allocation2 + $0x8] sm:$0xff] %v228
  %245 = vst [vmem:[#allocation2 + $0x10] sm:$0xff] %v229
  %246 = vst [vmem:[#allocation2 + $0x18] sm:$0xff] %v230
  %247 = vst [vmem:[#allocation2 + $0x20] sm:$0xff] %v231
  %248 = vst [vmem:[#allocation2 + $0x28] sm:$0xff] %v232
  %249 = vst [vmem:[#allocation2 + $0x30] sm:$0xff] %v233
  %250 = vst [vmem:[#allocation2 + $0x38] sm:$0xff] %v234
  %251 = vst [vmem:[#allocation2 + $0x40] sm:$0xff] %v235
  %252 = vst [vmem:[#allocation2 + $0x48] sm:$0xff] %v236
  %253 = vst [vmem:[#allocation2 + $0x50] sm:$0xff] %v237
  %254 = vst [vmem:[#allocation2 + $0x58] sm:$0xff] %v238
  %255 = vst [vmem:[#allocation2 + $0x60] sm:$0xff] %v239
  %256 = vst [vmem:[#allocation2 + $0x68] sm:$0xff] %v240
  %257 = vst [vmem:[#allocation2 + $0x70] sm:$0xff] %v241
  %258 = vst [vmem:[#allocation2 + $0x78] sm:$0xff] %v242
  // Predicated region
  $region18: #{_gclip_forward.12} parent=0 // pred_check
    %p259 = pneg %p14
  $region19: #{_gclip_forward.12} parent=0 // pred_check_branch
    %261 = sbr.rel (%p259) target = $region21
  $region20: #{_gclip_forward.12} parent=0 // pred_region
    %v262 = vld [vmem:[#allocation2] sm:$0xff]
    %v263 = vld [vmem:[#allocation2 + $0x8] sm:$0xff]
    %v264 = vld [vmem:[#allocation2 + $0x10] sm:$0xff]
    %v265 = vld [vmem:[#allocation2 + $0x18] sm:$0xff]
    %v266 = vld [vmem:[#allocation2 + $0x20] sm:$0xff]
    %v267 = vld [vmem:[#allocation2 + $0x28] sm:$0xff]
    %v268 = vld [vmem:[#allocation2 + $0x30] sm:$0xff]
    %v269 = vld [vmem:[#allocation2 + $0x38] sm:$0xff]
    %v270 = vld [vmem:[#allocation2 + $0x40] sm:$0xff]
    %v271 = vld [vmem:[#allocation2 + $0x48] sm:$0xff]
    %v272 = vld [vmem:[#allocation2 + $0x50] sm:$0xff]
    %v273 = vld [vmem:[#allocation2 + $0x58] sm:$0xff]
    %v274 = vld [vmem:[#allocation2 + $0x60] sm:$0xff]
    %v275 = vld [vmem:[#allocation2 + $0x68] sm:$0xff]
    %v276 = vld [vmem:[#allocation2 + $0x70] sm:$0xff]
    %v277 = vld [vmem:[#allocation2 + $0x78] sm:$0xff]
    %v278 = vld [vmem:[%s2] sm:$0x1]
    %v280 = vlaneseq
    %v281 = vshrl.u32 %v280, 7
    %v282 = vsub.s32 0, %v281
    %v283 = vrot.slane %v278, %v282
    %v285 = vadd.f32 %v262, %v283
    %v286 = vadd.f32 %v263, %v283
    %v287 = vadd.f32 %v264, %v283
    %v288 = vadd.f32 %v265, %v283
    %v289 = vadd.f32 %v266, %v283
    %v290 = vadd.f32 %v267, %v283
    %v291 = vadd.f32 %v268, %v283
    %v292 = vadd.f32 %v269, %v283
    %v293 = vadd.f32 %v270, %v283
    %v294 = vadd.f32 %v271, %v283
    %v295 = vadd.f32 %v272, %v283
    %v296 = vadd.f32 %v273, %v283
    %v297 = vadd.f32 %v274, %v283
    %v298 = vadd.f32 %v275, %v283
    %v299 = vadd.f32 %v276, %v283
    %v300 = vadd.f32 %v277, %v283
    %v301 = vmax.f32 %v285, 0.0
    %v302 = vmax.f32 %v286, 0.0
    %v303 = vmax.f32 %v287, 0.0
    %v304 = vmax.f32 %v288, 0.0
    %v305 = vmax.f32 %v289, 0.0
    %v306 = vmax.f32 %v290, 0.0
    %v307 = vmax.f32 %v291, 0.0
    %v308 = vmax.f32 %v292, 0.0
    %v309 = vmax.f32 %v293, 0.0
    %v310 = vmax.f32 %v294, 0.0
    %v311 = vmax.f32 %v295, 0.0
    %v312 = vmax.f32 %v296, 0.0
    %v313 = vmax.f32 %v297, 0.0
    %v314 = vmax.f32 %v298, 0.0
    %v315 = vmax.f32 %v299, 0.0
    %v316 = vmax.f32 %v300, 0.0
    %317 = vst [vmem:[%s3] sm:$0xff] %v301
    %318 = vst [vmem:[%s3 + $0x8] sm:$0xff] %v302
    %319 = vst [vmem:[%s3 + $0x10] sm:$0xff] %v303
    %320 = vst [vmem:[%s3 + $0x18] sm:$0xff] %v304
    %321 = vst [vmem:[%s3 + $0x20] sm:$0xff] %v305
    %322 = vst [vmem:[%s3 + $0x28] sm:$0xff] %v306
    %323 = vst [vmem:[%s3 + $0x30] sm:$0xff] %v307
    %324 = vst [vmem:[%s3 + $0x38] sm:$0xff] %v308
    %325 = vst [vmem:[%s3 + $0x40] sm:$0xff] %v309
    %326 = vst [vmem:[%s3 + $0x48] sm:$0xff] %v310
    %327 = vst [vmem:[%s3 + $0x50] sm:$0xff] %v311
    %328 = vst [vmem:[%s3 + $0x58] sm:$0xff] %v312
    %329 = vst [vmem:[%s3 + $0x60] sm:$0xff] %v313
    %330 = vst [vmem:[%s3 + $0x68] sm:$0xff] %v314
    %331 = vst [vmem:[%s3 + $0x70] sm:$0xff] %v315
    %332 = vst [vmem:[%s3 + $0x78] sm:$0xff] %v316
  $region21: #{_gclip_forward.12} parent=0 // pred_fallthru
    _
  // Predicated region
  $region22: #{_gclip_forward.12} parent=0 // pred_check
    _
  $region23: #{_gclip_forward.12} parent=0 // pred_check_branch
    %334 = sbr.rel (0) target = $region25
  $region24: #{_gclip_forward.12} parent=0 // pred_region
    _
  $region25: #{_gclip_forward.12} parent=0 // pred_fallthru
    _
  // Predicated region
  $region26: #{_gclip_forward.12} parent=0 // pred_check
    _
  $region27: #{_gclip_forward.12} parent=0 // pred_check_branch
    %336 = sbr.rel (0) target = $region29
  $region28: #{_gclip_forward.12} parent=0 // pred_region
    _
  $region29: #{_gclip_forward.12} parent=0 // pred_fallthru
    _

// kernel: _gclip_forward.11
$region0: #{_gclip_forward.11}
  #allocation0 [shape = 'u32[]', space=smem, size = 0x4, offset = 0x4, fixed_abs, tag = 'smem constant byte address 0x4 - core index']
  #allocation1 [shape = 'u32[144,128]{1,0:T(1,128)}', space=vmem, size = 0x12000, scoped, tag = 'internal scratch']
  #allocation2 [shape = 'f32[128,128]{1,0:T(8,128)}', space=vmem, size = 0x10000, scoped, tag = 'scratch operand']
  %s0 = inlined_call_operand.vmem [shape: f32[128,128], index: 0, kind: input, shape index: {}]
  %s1 = inlined_call_operand.vmem [shape: f32[128,128], index: 1, kind: input, shape index: {}]
  %s2 = inlined_call_operand.vmem [shape: f32[1,128], index: 2, kind: input, shape index: {}]
  %s3 = inlined_call_operand.vmem [shape: f32[128,128], index: 3, kind: output, shape index: {}]
  %s4 = sld [smem:[#allocation0]]
  $region30: #{_gclip_forward.11} parent=0
    _
  %s6 = ssub.s32 1, %s4
  %s7 = scalar_select 0, %s6, %s4
  // Predicated region
  $region2: #{_gclip_forward.11} parent=0 // pred_check
    _
  $region3: #{_gclip_forward.11} parent=0 // pred_check_branch
    %9 = sbr.rel (0) target = $region5
  $region4: #{_gclip_forward.11} parent=0 // pred_region
    _
  $region5: #{_gclip_forward.11} parent=0 // pred_fallthru
    _
  // Predicated region
  $region6: #{_gclip_forward.11} parent=0 // pred_check
    _
  $region7: #{_gclip_forward.11} parent=0 // pred_check_branch
    %11 = sbr.rel (0) target = $region9
  $region8: #{_gclip_forward.11} parent=0 // pred_region
    _
  $region9: #{_gclip_forward.11} parent=0 // pred_fallthru
    _
  // Predicated region
  $region10: #{_gclip_forward.11} parent=0 // pred_check
    _
  $region11: #{_gclip_forward.11} parent=0 // pred_check_branch
    %13 = sbr.rel (0) target = $region13
  $region12: #{_gclip_forward.11} parent=0 // pred_region
    _
  $region13: #{_gclip_forward.11} parent=0 // pred_fallthru
    _
  %p14 = scmp.eq.s32.totalorder 0, 0
  // Predicated region
  $region14: #{_gclip_forward.11} parent=0 // pred_check
    %p15 = pneg %p14
  $region15: #{_gclip_forward.11} parent=0 // pred_check_branch
    %17 = sbr.rel (%p15) target = $region17
  $region16: #{_gclip_forward.11} parent=0 // pred_region
    %18 = vst [vmem:[#allocation2] sm:$0xff] 0.0
    %19 = vst [vmem:[#allocation2 + $0x8] sm:$0xff] 0.0
    %20 = vst [vmem:[#allocation2 + $0x10] sm:$0xff] 0.0
    %21 = vst [vmem:[#allocation2 + $0x18] sm:$0xff] 0.0
    %22 = vst [vmem:[#allocation2 + $0x20] sm:$0xff] 0.0
    %23 = vst [vmem:[#allocation2 + $0x28] sm:$0xff] 0.0
    %24 = vst [vmem:[#allocation2 + $0x30] sm:$0xff] 0.0
    %25 = vst [vmem:[#allocation2 + $0x38] sm:$0xff] 0.0
    %26 = vst [vmem:[#allocation2 + $0x40] sm:$0xff] 0.0
    %27 = vst [vmem:[#allocation2 + $0x48] sm:$0xff] 0.0
    %28 = vst [vmem:[#allocation2 + $0x50] sm:$0xff] 0.0
    %29 = vst [vmem:[#allocation2 + $0x58] sm:$0xff] 0.0
    %30 = vst [vmem:[#allocation2 + $0x60] sm:$0xff] 0.0
    %31 = vst [vmem:[#allocation2 + $0x68] sm:$0xff] 0.0
    %32 = vst [vmem:[#allocation2 + $0x70] sm:$0xff] 0.0
    %33 = vst [vmem:[#allocation2 + $0x78] sm:$0xff] 0.0
  $region17: #{_gclip_forward.11} parent=0 // pred_fallthru
    _
  %v34 = vld [vmem:[#allocation2] sm:$0xff]
  %v35 = vld [vmem:[#allocation2 + $0x8] sm:$0xff]
  %v36 = vld [vmem:[#allocation2 + $0x10] sm:$0xff]
  %v37 = vld [vmem:[#allocation2 + $0x18] sm:$0xff]
  %v38 = vld [vmem:[#allocation2 + $0x20] sm:$0xff]
  %v39 = vld [vmem:[#allocation2 + $0x28] sm:$0xff]
  %v40 = vld [vmem:[#allocation2 + $0x30] sm:$0xff]
  %v41 = vld [vmem:[#allocation2 + $0x38] sm:$0xff]
  %v42 = vld [vmem:[#allocation2 + $0x40] sm:$0xff]
  %v43 = vld [vmem:[#allocation2 + $0x48] sm:$0xff]
  %v44 = vld [vmem:[#allocation2 + $0x50] sm:$0xff]
  %v45 = vld [vmem:[#allocation2 + $0x58] sm:$0xff]
  %v46 = vld [vmem:[#allocation2 + $0x60] sm:$0xff]
  %v47 = vld [vmem:[#allocation2 + $0x68] sm:$0xff]
  %v48 = vld [vmem:[#allocation2 + $0x70] sm:$0xff]
  %v49 = vld [vmem:[#allocation2 + $0x78] sm:$0xff]
  %v50 = vld [vmem:[%s0] sm:$0xff]
  %v51 = vld [vmem:[%s0 + $0x8] sm:$0xff]
  %v52 = vld [vmem:[%s0 + $0x10] sm:$0xff]
  %v53 = vld [vmem:[%s0 + $0x18] sm:$0xff]
  %v54 = vld [vmem:[%s0 + $0x20] sm:$0xff]
  %v55 = vld [vmem:[%s0 + $0x28] sm:$0xff]
  %v56 = vld [vmem:[%s0 + $0x30] sm:$0xff]
  %v57 = vld [vmem:[%s0 + $0x38] sm:$0xff]
  %v58 = vld [vmem:[%s0 + $0x40] sm:$0xff]
  %v59 = vld [vmem:[%s0 + $0x48] sm:$0xff]
  %v60 = vld [vmem:[%s0 + $0x50] sm:$0xff]
  %v61 = vld [vmem:[%s0 + $0x58] sm:$0xff]
  %v62 = vld [vmem:[%s0 + $0x60] sm:$0xff]
  %v63 = vld [vmem:[%s0 + $0x68] sm:$0xff]
  %v64 = vld [vmem:[%s0 + $0x70] sm:$0xff]
  %v65 = vld [vmem:[%s0 + $0x78] sm:$0xff]
  %v66 = vld [vmem:[%s1] sm:$0xff]
  %v67 = vld [vmem:[%s1 + $0x8] sm:$0xff]
  %v68 = vld [vmem:[%s1 + $0x10] sm:$0xff]
  %v69 = vld [vmem:[%s1 + $0x18] sm:$0xff]
  %v70 = vld [vmem:[%s1 + $0x20] sm:$0xff]
  %v71 = vld [vmem:[%s1 + $0x28] sm:$0xff]
  %v72 = vld [vmem:[%s1 + $0x30] sm:$0xff]
  %v73 = vld [vmem:[%s1 + $0x38] sm:$0xff]
  %v74 = vld [vmem:[%s1 + $0x40] sm:$0xff]
  %v75 = vld [vmem:[%s1 + $0x48] sm:$0xff]
  %v76 = vld [vmem:[%s1 + $0x50] sm:$0xff]
  %v77 = vld [vmem:[%s1 + $0x58] sm:$0xff]
  %v78 = vld [vmem:[%s1 + $0x60] sm:$0xff]
  %v79 = vld [vmem:[%s1 + $0x68] sm:$0xff]
  %v80 = vld [vmem:[%s1 + $0x70] sm:$0xff]
  %v81 = vld [vmem:[%s1 + $0x78] sm:$0xff]
  %82 = vmatprep.subr.mxu0 0.0
  %83 = vmatpush1.msra.mxu0 %v66
  %84 = vmatprep.subr.mxu0 0.0
  %85 = vmatpush1.msra.mxu0 %v67
  %86 = vmatprep.subr.mxu0 0.0
  %87 = vmatpush1.msra.mxu0 %v68
  %88 = vmatprep.subr.mxu0 0.0
  %89 = vmatpush1.msra.mxu0 %v69
  %90 = vmatprep.subr.mxu0 0.0
  %91 = vmatpush1.msra.mxu0 %v70
  %92 = vmatprep.subr.mxu0 0.0
  %93 = vmatpush1.msra.mxu0 %v71
  %94 = vmatprep.subr.mxu0 0.0
  %95 = vmatpush1.msra.mxu0 %v72
  %96 = vmatprep.subr.mxu0 0.0
  %97 = vmatpush1.msra.mxu0 %v73
  %98 = vmatprep.subr.mxu0 0.0
  %99 = vmatpush1.msra.mxu0 %v74
  %100 = vmatprep.subr.mxu0 0.0
  %101 = vmatpush1.msra.mxu0 %v75
  %102 = vmatprep.subr.mxu0 0.0
  %103 = vmatpush1.msra.mxu0 %v76
  %104 = vmatprep.subr.mxu0 0.0
  %105 = vmatpush1.msra.mxu0 %v77
  %106 = vmatprep.subr.mxu0 0.0
  %107 = vmatpush1.msra.mxu0 %v78
  %108 = vmatprep.subr.mxu0 0.0
  %109 = vmatpush1.msra.mxu0 %v79
  %110 = vmatprep.subr.mxu0 0.0
  %111 = vmatpush1.msra.mxu0 %v80
  %112 = vmatprep.subr.mxu0 0.0
  %113 = vmatpush1.msra.mxu0 %v81
  %114 = vmatprep.subr.mxu0 0.0
  %115 = vmatpush1.msra.mxu0 0.0
  %116 = vmatprep.subr.mxu0 0.0
  %117 = vmatpush1.msra.mxu0 0.0
  %118 = vmatprep.subr.mxu0 0.0
  %119 = vmatpush1.msra.mxu0 0.0
  %120 = vmatprep.subr.mxu0 0.0
  %121 = vmatpush1.msra.mxu0 0.0
  %122 = vmatprep.subr.mxu0 0.0
  %123 = vmatpush1.msra.mxu0 0.0
  %124 = vmatprep.subr.mxu0 0.0
  %125 = vmatpush1.msra.mxu0 0.0
  %126 = vmatprep.subr.mxu0 0.0
  %127 = vmatpush1.msra.mxu0 0.0
  %128 = vmatprep.subr.mxu0 0.0
  %129 = vmatpush1.msra.mxu0 0.0
  %130 = vmatprep.subr.mxu0 0.0
  %131 = vmatpush1.msra.mxu0 0.0
  %132 = vmatprep.subr.mxu0 0.0
  %133 = vmatpush1.msra.mxu0 0.0
  %134 = vmatprep.subr.mxu0 0.0
  %135 = vmatpush1.msra.mxu0 0.0
  %136 = vmatprep.subr.mxu0 0.0
  %137 = vmatpush1.msra.mxu0 0.0
  %138 = vmatprep.subr.mxu0 0.0
  %139 = vmatpush1.msra.mxu0 0.0
  %140 = vmatprep.subr.mxu0 0.0
  %141 = vmatpush1.msra.mxu0 0.0
  %142 = vmatprep.subr.mxu0 0.0
  %143 = vmatpush1.msra.mxu0 0.0
  %144 = vmatprep.subr.mxu0 0.0
  %145 = vmatpush1.msra.mxu0 0.0
  %146 = vmatprep.mubr.f32.mxu0 0.0
  %147 = vmatmul.mubr.f32.gmra.mrb[0].mxu0 %v50
  %v148 = vpop.f32.mrb[0].mxu0
  %v149 = vadd.f32 0.0, %v148
  %v150 = vpop.f32.mrb[0].mxu0
  %151 = vmatprep.mubr.f32.mxu0 0.0
  %152 = vmatmul.mubr.f32.gmra.mrb[0].mxu0 %v51
  %v153 = vpop.f32.mrb[0].mxu0
  %v154 = vadd.f32 0.0, %v153
  %v155 = vpop.f32.mrb[0].mxu0
  %156 = vmatprep.mubr.f32.mxu0 0.0
  %157 = vmatmul.mubr.f32.gmra.mrb[0].mxu0 %v52
  %v158 = vpop.f32.mrb[0].mxu0
  %v159 = vadd.f32 0.0, %v158
  %v160 = vpop.f32.mrb[0].mxu0
  %161 = vmatprep.mubr.f32.mxu0 0.0
  %162 = vmatmul.mubr.f32.gmra.mrb[0].mxu0 %v53
  %v163 = vpop.f32.mrb[0].mxu0
  %v164 = vadd.f32 0.0, %v163
  %v165 = vpop.f32.mrb[0].mxu0
  %166 = vmatprep.mubr.f32.mxu0 0.0
  %167 = vmatmul.mubr.f32.gmra.mrb[0].mxu0 %v54
  %v168 = vpop.f32.mrb[0].mxu0
  %v169 = vadd.f32 0.0, %v168
  %v170 = vpop.f32.mrb[0].mxu0
  %171 = vmatprep.mubr.f32.mxu0 0.0
  %172 = vmatmul.mubr.f32.gmra.mrb[0].mxu0 %v55
  %v173 = vpop.f32.mrb[0].mxu0
  %v174 = vadd.f32 0.0, %v173
  %v175 = vpop.f32.mrb[0].mxu0
  %176 = vmatprep.mubr.f32.mxu0 0.0
  %177 = vmatmul.mubr.f32.gmra.mrb[0].mxu0 %v56
  %v178 = vpop.f32.mrb[0].mxu0
  %v179 = vadd.f32 0.0, %v178
  %v180 = vpop.f32.mrb[0].mxu0
  %181 = vmatprep.mubr.f32.mxu0 0.0
  %182 = vmatmul.mubr.f32.gmra.mrb[0].mxu0 %v57
  %v183 = vpop.f32.mrb[0].mxu0
  %v184 = vadd.f32 0.0, %v183
  %v185 = vpop.f32.mrb[0].mxu0
  %186 = vmatprep.mubr.f32.mxu0 0.0
  %187 = vmatmul.mubr.f32.gmra.mrb[0].mxu0 %v58
  %v188 = vpop.f32.mrb[0].mxu0
  %v189 = vadd.f32 0.0, %v188
  %v190 = vpop.f32.mrb[0].mxu0
  %191 = vmatprep.mubr.f32.mxu0 0.0
  %192 = vmatmul.mubr.f32.gmra.mrb[0].mxu0 %v59
  %v193 = vpop.f32.mrb[0].mxu0
  %v194 = vadd.f32 0.0, %v193
  %v195 = vpop.f32.mrb[0].mxu0
  %196 = vmatprep.mubr.f32.mxu0 0.0
  %197 = vmatmul.mubr.f32.gmra.mrb[0].mxu0 %v60
  %v198 = vpop.f32.mrb[0].mxu0
  %v199 = vadd.f32 0.0, %v198
  %v200 = vpop.f32.mrb[0].mxu0
  %201 = vmatprep.mubr.f32.mxu0 0.0
  %202 = vmatmul.mubr.f32.gmra.mrb[0].mxu0 %v61
  %v203 = vpop.f32.mrb[0].mxu0
  %v204 = vadd.f32 0.0, %v203
  %v205 = vpop.f32.mrb[0].mxu0
  %206 = vmatprep.mubr.f32.mxu0 0.0
  %207 = vmatmul.mubr.f32.gmra.mrb[0].mxu0 %v62
  %v208 = vpop.f32.mrb[0].mxu0
  %v209 = vadd.f32 0.0, %v208
  %v210 = vpop.f32.mrb[0].mxu0
  %211 = vmatprep.mubr.f32.mxu0 0.0
  %212 = vmatmul.mubr.f32.gmra.mrb[0].mxu0 %v63
  %v213 = vpop.f32.mrb[0].mxu0
  %v214 = vadd.f32 0.0, %v213
  %v215 = vpop.f32.mrb[0].mxu0
  %216 = vmatprep.mubr.f32.mxu0 0.0
  %217 = vmatmul.mubr.f32.gmra.mrb[0].mxu0 %v64
  %v218 = vpop.f32.mrb[0].mxu0
  %v219 = vadd.f32 0.0, %v218
  %v220 = vpop.f32.mrb[0].mxu0
  %221 = vmatprep.mubr.f32.mxu0 0.0
  %222 = vmatmul.mubr.f32.gmra.mrb[0].mxu0 %v65
  %v223 = vpop.f32.mrb[0].mxu0
  %v224 = vadd.f32 0.0, %v223
  %v225 = vpop.f32.mrb[0].mxu0
  %226 = vdwg.mxu0
  %v227 = vadd.f32 %v34, %v149
  %v228 = vadd.f32 %v35, %v154
  %v229 = vadd.f32 %v36, %v159
  %v230 = vadd.f32 %v37, %v164
  %v231 = vadd.f32 %v38, %v169
  %v232 = vadd.f32 %v39, %v174
  %v233 = vadd.f32 %v40, %v179
  %v234 = vadd.f32 %v41, %v184
  %v235 = vadd.f32 %v42, %v189
  %v236 = vadd.f32 %v43, %v194
  %v237 = vadd.f32 %v44, %v199
  %v238 = vadd.f32 %v45, %v204
  %v239 = vadd.f32 %v46, %v209
  %v240 = vadd.f32 %v47, %v214
  %v241 = vadd.f32 %v48, %v219
  %v242 = vadd.f32 %v49, %v224
  %243 = vst [vmem:[#allocation2] sm:$0xff] %v227
  %244 = vst [vmem:[#allocation2 + $0x8] sm:$0xff] %v228
  %245 = vst [vmem:[#allocation2 + $0x10] sm:$0xff] %v229
  %246 = vst [vmem:[#allocation2 + $0x18] sm:$0xff] %v230
  %247 = vst [vmem:[#allocation2 + $0x20] sm:$0xff] %v231
  %248 = vst [vmem:[#allocation2 + $0x28] sm:$0xff] %v232
  %249 = vst [vmem:[#allocation2 + $0x30] sm:$0xff] %v233
  %250 = vst [vmem:[#allocation2 + $0x38] sm:$0xff] %v234
  %251 = vst [vmem:[#allocation2 + $0x40] sm:$0xff] %v235
  %252 = vst [vmem:[#allocation2 + $0x48] sm:$0xff] %v236
  %253 = vst [vmem:[#allocation2 + $0x50] sm:$0xff] %v237
  %254 = vst [vmem:[#allocation2 + $0x58] sm:$0xff] %v238
  %255 = vst [vmem:[#allocation2 + $0x60] sm:$0xff] %v239
  %256 = vst [vmem:[#allocation2 + $0x68] sm:$0xff] %v240
  %257 = vst [vmem:[#allocation2 + $0x70] sm:$0xff] %v241
  %258 = vst [vmem:[#allocation2 + $0x78] sm:$0xff] %v242
  // Predicated region
  $region18: #{_gclip_forward.11} parent=0 // pred_check
    %p259 = pneg %p14
  $region19: #{_gclip_forward.11} parent=0 // pred_check_branch
    %261 = sbr.rel (%p259) target = $region21
  $region20: #{_gclip_forward.11} parent=0 // pred_region
    %v262 = vld [vmem:[#allocation2] sm:$0xff]
    %v263 = vld [vmem:[#allocation2 + $0x8] sm:$0xff]
    %v264 = vld [vmem:[#allocation2 + $0x10] sm:$0xff]
    %v265 = vld [vmem:[#allocation2 + $0x18] sm:$0xff]
    %v266 = vld [vmem:[#allocation2 + $0x20] sm:$0xff]
    %v267 = vld [vmem:[#allocation2 + $0x28] sm:$0xff]
    %v268 = vld [vmem:[#allocation2 + $0x30] sm:$0xff]
    %v269 = vld [vmem:[#allocation2 + $0x38] sm:$0xff]
    %v270 = vld [vmem:[#allocation2 + $0x40] sm:$0xff]
    %v271 = vld [vmem:[#allocation2 + $0x48] sm:$0xff]
    %v272 = vld [vmem:[#allocation2 + $0x50] sm:$0xff]
    %v273 = vld [vmem:[#allocation2 + $0x58] sm:$0xff]
    %v274 = vld [vmem:[#allocation2 + $0x60] sm:$0xff]
    %v275 = vld [vmem:[#allocation2 + $0x68] sm:$0xff]
    %v276 = vld [vmem:[#allocation2 + $0x70] sm:$0xff]
    %v277 = vld [vmem:[#allocation2 + $0x78] sm:$0xff]
    %v278 = vld [vmem:[%s2] sm:$0x1]
    %v280 = vlaneseq
    %v281 = vshrl.u32 %v280, 7
    %v282 = vsub.s32 0, %v281
    %v283 = vrot.slane %v278, %v282
    %v285 = vadd.f32 %v262, %v283
    %v286 = vadd.f32 %v263, %v283
    %v287 = vadd.f32 %v264, %v283
    %v288 = vadd.f32 %v265, %v283
    %v289 = vadd.f32 %v266, %v283
    %v290 = vadd.f32 %v267, %v283
    %v291 = vadd.f32 %v268, %v283
    %v292 = vadd.f32 %v269, %v283
    %v293 = vadd.f32 %v270, %v283
    %v294 = vadd.f32 %v271, %v283
    %v295 = vadd.f32 %v272, %v283
    %v296 = vadd.f32 %v273, %v283
    %v297 = vadd.f32 %v274, %v283
    %v298 = vadd.f32 %v275, %v283
    %v299 = vadd.f32 %v276, %v283
    %v300 = vadd.f32 %v277, %v283
    %301 = vst [vmem:[%s3] sm:$0xff] %v285
    %302 = vst [vmem:[%s3 + $0x8] sm:$0xff] %v286
    %303 = vst [vmem:[%s3 + $0x10] sm:$0xff] %v287
    %304 = vst [vmem:[%s3 + $0x18] sm:$0xff] %v288
    %305 = vst [vmem:[%s3 + $0x20] sm:$0xff] %v289
    %306 = vst [vmem:[%s3 + $0x28] sm:$0xff] %v290
    %307 = vst [vmem:[%s3 + $0x30] sm:$0xff] %v291
    %308 = vst [vmem:[%s3 + $0x38] sm:$0xff] %v292
    %309 = vst [vmem:[%s3 + $0x40] sm:$0xff] %v293
    %310 = vst [vmem:[%s3 + $0x48] sm:$0xff] %v294
    %311 = vst [vmem:[%s3 + $0x50] sm:$0xff] %v295
    %312 = vst [vmem:[%s3 + $0x58] sm:$0xff] %v296
    %313 = vst [vmem:[%s3 + $0x60] sm:$0xff] %v297
    %314 = vst [vmem:[%s3 + $0x68] sm:$0xff] %v298
    %315 = vst [vmem:[%s3 + $0x70] sm:$0xff] %v299
    %316 = vst [vmem:[%s3 + $0x78] sm:$0xff] %v300
  $region21: #{_gclip_forward.11} parent=0 // pred_fallthru
    _
  // Predicated region
  $region22: #{_gclip_forward.11} parent=0 // pred_check
    _
  $region23: #{_gclip_forward.11} parent=0 // pred_check_branch
    %318 = sbr.rel (0) target = $region25
  $region24: #{_gclip_forward.11} parent=0 // pred_region
    _
  $region25: #{_gclip_forward.11} parent=0 // pred_fallthru
    _
  // Predicated region
  $region26: #{_gclip_forward.11} parent=0 // pred_check
    _
  $region27: #{_gclip_forward.11} parent=0 // pred_check_branch
    %320 = sbr.rel (0) target = $region29
  $region28: #{_gclip_forward.11} parent=0 // pred_region
    _
  $region29: #{_gclip_forward.11} parent=0 // pred_fallthru
    _

// kernel: _gclip_forward.14
$region0: #{_gclip_forward.14}
  #allocation0 [shape = 'u32[]', space=smem, size = 0x4, offset = 0x4, fixed_abs, tag = 'smem constant byte address 0x4 - core index']
  #allocation1 [shape = 'u32[144,128]{1,0:T(1,128)}', space=vmem, size = 0x12000, scoped, tag = 'internal scratch']
  #allocation2 [shape = 'f32[128,128]{1,0:T(8,128)}', space=vmem, size = 0x10000, scoped, tag = 'scratch operand']
  %s0 = inlined_call_operand.vmem [shape: f32[128,128], index: 0, kind: input, shape index: {}]
  %s1 = inlined_call_operand.vmem [shape: f32[128,128], index: 1, kind: input, shape index: {}]
  %s2 = inlined_call_operand.vmem [shape: f32[1,128], index: 2, kind: input, shape index: {}]
  %s3 = inlined_call_operand.vmem [shape: f32[128,128], index: 3, kind: output, shape index: {0}]
  %s4 = inlined_call_operand.vmem [shape: f32[128,128], index: 4, kind: output, shape index: {1}]
  %5 = xla_tuple %s3, %s4
  %s6 = sld [smem:[#allocation0]]
  $region38: #{_gclip_forward.14} parent=0
    _
  %s8 = ssub.s32 1, %s6
  %s9 = scalar_select 0, %s8, %s6
  // Predicated region
  $region2: #{_gclip_forward.14} parent=0 // pred_check
    _
  $region3: #{_gclip_forward.14} parent=0 // pred_check_branch
    %11 = sbr.rel (0) target = $region5
  $region4: #{_gclip_forward.14} parent=0 // pred_region
    _
  $region5: #{_gclip_forward.14} parent=0 // pred_fallthru
    _
  // Predicated region
  $region6: #{_gclip_forward.14} parent=0 // pred_check
    _
  $region7: #{_gclip_forward.14} parent=0 // pred_check_branch
    %13 = sbr.rel (0) target = $region9
  $region8: #{_gclip_forward.14} parent=0 // pred_region
    _
  $region9: #{_gclip_forward.14} parent=0 // pred_fallthru
    _
  // Predicated region
  $region10: #{_gclip_forward.14} parent=0 // pred_check
    _
  $region11: #{_gclip_forward.14} parent=0 // pred_check_branch
    %15 = sbr.rel (0) target = $region13
  $region12: #{_gclip_forward.14} parent=0 // pred_region
    _
  $region13: #{_gclip_forward.14} parent=0 // pred_fallthru
    _
  %p16 = scmp.eq.s32.totalorder 0, 0
  // Predicated region
  $region14: #{_gclip_forward.14} parent=0 // pred_check
    %p17 = pneg %p16
  $region15: #{_gclip_forward.14} parent=0 // pred_check_branch
    %19 = sbr.rel (%p17) target = $region17
  $region16: #{_gclip_forward.14} parent=0 // pred_region
    %20 = vst [vmem:[#allocation2] sm:$0xff] 0.0
    %21 = vst [vmem:[#allocation2 + $0x8] sm:$0xff] 0.0
    %22 = vst [vmem:[#allocation2 + $0x10] sm:$0xff] 0.0
    %23 = vst [vmem:[#allocation2 + $0x18] sm:$0xff] 0.0
    %24 = vst [vmem:[#allocation2 + $0x20] sm:$0xff] 0.0
    %25 = vst [vmem:[#allocation2 + $0x28] sm:$0xff] 0.0
    %26 = vst [vmem:[#allocation2 + $0x30] sm:$0xff] 0.0
    %27 = vst [vmem:[#allocation2 + $0x38] sm:$0xff] 0.0
    %28 = vst [vmem:[#allocation2 + $0x40] sm:$0xff] 0.0
    %29 = vst [vmem:[#allocation2 + $0x48] sm:$0xff] 0.0
    %30 = vst [vmem:[#allocation2 + $0x50] sm:$0xff] 0.0
    %31 = vst [vmem:[#allocation2 + $0x58] sm:$0xff] 0.0
    %32 = vst [vmem:[#allocation2 + $0x60] sm:$0xff] 0.0
    %33 = vst [vmem:[#allocation2 + $0x68] sm:$0xff] 0.0
    %34 = vst [vmem:[#allocation2 + $0x70] sm:$0xff] 0.0
    %35 = vst [vmem:[#allocation2 + $0x78] sm:$0xff] 0.0
  $region17: #{_gclip_forward.14} parent=0 // pred_fallthru
    _
  %v36 = vld [vmem:[#allocation2] sm:$0xff]
  %v37 = vld [vmem:[#allocation2 + $0x8] sm:$0xff]
  %v38 = vld [vmem:[#allocation2 + $0x10] sm:$0xff]
  %v39 = vld [vmem:[#allocation2 + $0x18] sm:$0xff]
  %v40 = vld [vmem:[#allocation2 + $0x20] sm:$0xff]
  %v41 = vld [vmem:[#allocation2 + $0x28] sm:$0xff]
  %v42 = vld [vmem:[#allocation2 + $0x30] sm:$0xff]
  %v43 = vld [vmem:[#allocation2 + $0x38] sm:$0xff]
  %v44 = vld [vmem:[#allocation2 + $0x40] sm:$0xff]
  %v45 = vld [vmem:[#allocation2 + $0x48] sm:$0xff]
  %v46 = vld [vmem:[#allocation2 + $0x50] sm:$0xff]
  %v47 = vld [vmem:[#allocation2 + $0x58] sm:$0xff]
  %v48 = vld [vmem:[#allocation2 + $0x60] sm:$0xff]
  %v49 = vld [vmem:[#allocation2 + $0x68] sm:$0xff]
  %v50 = vld [vmem:[#allocation2 + $0x70] sm:$0xff]
  %v51 = vld [vmem:[#allocation2 + $0x78] sm:$0xff]
  %v52 = vld [vmem:[%s0] sm:$0xff]
  %v53 = vld [vmem:[%s0 + $0x8] sm:$0xff]
  %v54 = vld [vmem:[%s0 + $0x10] sm:$0xff]
  %v55 = vld [vmem:[%s0 + $0x18] sm:$0xff]
  %v56 = vld [vmem:[%s0 + $0x20] sm:$0xff]
  %v57 = vld [vmem:[%s0 + $0x28] sm:$0xff]
  %v58 = vld [vmem:[%s0 + $0x30] sm:$0xff]
  %v59 = vld [vmem:[%s0 + $0x38] sm:$0xff]
  %v60 = vld [vmem:[%s0 + $0x40] sm:$0xff]
  %v61 = vld [vmem:[%s0 + $0x48] sm:$0xff]
  %v62 = vld [vmem:[%s0 + $0x50] sm:$0xff]
  %v63 = vld [vmem:[%s0 + $0x58] sm:$0xff]
  %v64 = vld [vmem:[%s0 + $0x60] sm:$0xff]
  %v65 = vld [vmem:[%s0 + $0x68] sm:$0xff]
  %v66 = vld [vmem:[%s0 + $0x70] sm:$0xff]
  %v67 = vld [vmem:[%s0 + $0x78] sm:$0xff]
  %v68 = vld [vmem:[%s1] sm:$0xff]
  %v69 = vld [vmem:[%s1 + $0x8] sm:$0xff]
  %v70 = vld [vmem:[%s1 + $0x10] sm:$0xff]
  %v71 = vld [vmem:[%s1 + $0x18] sm:$0xff]
  %v72 = vld [vmem:[%s1 + $0x20] sm:$0xff]
  %v73 = vld [vmem:[%s1 + $0x28] sm:$0xff]
  %v74 = vld [vmem:[%s1 + $0x30] sm:$0xff]
  %v75 = vld [vmem:[%s1 + $0x38] sm:$0xff]
  %v76 = vld [vmem:[%s1 + $0x40] sm:$0xff]
  %v77 = vld [vmem:[%s1 + $0x48] sm:$0xff]
  %v78 = vld [vmem:[%s1 + $0x50] sm:$0xff]
  %v79 = vld [vmem:[%s1 + $0x58] sm:$0xff]
  %v80 = vld [vmem:[%s1 + $0x60] sm:$0xff]
  %v81 = vld [vmem:[%s1 + $0x68] sm:$0xff]
  %v82 = vld [vmem:[%s1 + $0x70] sm:$0xff]
  %v83 = vld [vmem:[%s1 + $0x78] sm:$0xff]
  %84 = vmatprep.subr.mxu0 0.0
  %85 = vmatpush1.msra.mxu0 %v68
  %86 = vmatprep.subr.mxu0 0.0
  %87 = vmatpush1.msra.mxu0 %v69
  %88 = vmatprep.subr.mxu0 0.0
  %89 = vmatpush1.msra.mxu0 %v70
  %90 = vmatprep.subr.mxu0 0.0
  %91 = vmatpush1.msra.mxu0 %v71
  %92 = vmatprep.subr.mxu0 0.0
  %93 = vmatpush1.msra.mxu0 %v72
  %94 = vmatprep.subr.mxu0 0.0
  %95 = vmatpush1.msra.mxu0 %v73
  %96 = vmatprep.subr.mxu0 0.0
  %97 = vmatpush1.msra.mxu0 %v74
  %98 = vmatprep.subr.mxu0 0.0
  %99 = vmatpush1.msra.mxu0 %v75
  %100 = vmatprep.subr.mxu0 0.0
  %101 = vmatpush1.msra.mxu0 %v76
  %102 = vmatprep.subr.mxu0 0.0
  %103 = vmatpush1.msra.mxu0 %v77
  %104 = vmatprep.subr.mxu0 0.0
  %105 = vmatpush1.msra.mxu0 %v78
  %106 = vmatprep.subr.mxu0 0.0
  %107 = vmatpush1.msra.mxu0 %v79
  %108 = vmatprep.subr.mxu0 0.0
  %109 = vmatpush1.msra.mxu0 %v80
  %110 = vmatprep.subr.mxu0 0.0
  %111 = vmatpush1.msra.mxu0 %v81
  %112 = vmatprep.subr.mxu0 0.0
  %113 = vmatpush1.msra.mxu0 %v82
  %114 = vmatprep.subr.mxu0 0.0
  %115 = vmatpush1.msra.mxu0 %v83
  %116 = vmatprep.subr.mxu0 0.0
  %117 = vmatpush1.msra.mxu0 0.0
  %118 = vmatprep.subr.mxu0 0.0
  %119 = vmatpush1.msra.mxu0 0.0
  %120 = vmatprep.subr.mxu0 0.0
  %121 = vmatpush1.msra.mxu0 0.0
  %122 = vmatprep.subr.mxu0 0.0
  %123 = vmatpush1.msra.mxu0 0.0
  %124 = vmatprep.subr.mxu0 0.0
  %125 = vmatpush1.msra.mxu0 0.0
  %126 = vmatprep.subr.mxu0 0.0
  %127 = vmatpush1.msra.mxu0 0.0
  %128 = vmatprep.subr.mxu0 0.0
  %129 = vmatpush1.msra.mxu0 0.0
  %130 = vmatprep.subr.mxu0 0.0
  %131 = vmatpush1.msra.mxu0 0.0
  %132 = vmatprep.subr.mxu0 0.0
  %133 = vmatpush1.msra.mxu0 0.0
  %134 = vmatprep.subr.mxu0 0.0
  %135 = vmatpush1.msra.mxu0 0.0
  %136 = vmatprep.subr.mxu0 0.0
  %137 = vmatpush1.msra.mxu0 0.0
  %138 = vmatprep.subr.mxu0 0.0
  %139 = vmatpush1.msra.mxu0 0.0
  %140 = vmatprep.subr.mxu0 0.0
  %141 = vmatpush1.msra.mxu0 0.0
  %142 = vmatprep.subr.mxu0 0.0
  %143 = vmatpush1.msra.mxu0 0.0
  %144 = vmatprep.subr.mxu0 0.0
  %145 = vmatpush1.msra.mxu0 0.0
  %146 = vmatprep.subr.mxu0 0.0
  %147 = vmatpush1.msra.mxu0 0.0
  %148 = vmatprep.mubr.f32.mxu0 0.0
  %149 = vmatmul.mubr.f32.gmra.mrb[0].mxu0 %v52
  %v150 = vpop.f32.mrb[0].mxu0
  %v151 = vadd.f32 0.0, %v150
  %v152 = vpop.f32.mrb[0].mxu0
  %153 = vmatprep.mubr.f32.mxu0 0.0
  %154 = vmatmul.mubr.f32.gmra.mrb[0].mxu0 %v53
  %v155 = vpop.f32.mrb[0].mxu0
  %v156 = vadd.f32 0.0, %v155
  %v157 = vpop.f32.mrb[0].mxu0
  %158 = vmatprep.mubr.f32.mxu0 0.0
  %159 = vmatmul.mubr.f32.gmra.mrb[0].mxu0 %v54
  %v160 = vpop.f32.mrb[0].mxu0
  %v161 = vadd.f32 0.0, %v160
  %v162 = vpop.f32.mrb[0].mxu0
  %163 = vmatprep.mubr.f32.mxu0 0.0
  %164 = vmatmul.mubr.f32.gmra.mrb[0].mxu0 %v55
  %v165 = vpop.f32.mrb[0].mxu0
  %v166 = vadd.f32 0.0, %v165
  %v167 = vpop.f32.mrb[0].mxu0
  %168 = vmatprep.mubr.f32.mxu0 0.0
  %169 = vmatmul.mubr.f32.gmra.mrb[0].mxu0 %v56
  %v170 = vpop.f32.mrb[0].mxu0
  %v171 = vadd.f32 0.0, %v170
  %v172 = vpop.f32.mrb[0].mxu0
  %173 = vmatprep.mubr.f32.mxu0 0.0
  %174 = vmatmul.mubr.f32.gmra.mrb[0].mxu0 %v57
  %v175 = vpop.f32.mrb[0].mxu0
  %v176 = vadd.f32 0.0, %v175
  %v177 = vpop.f32.mrb[0].mxu0
  %178 = vmatprep.mubr.f32.mxu0 0.0
  %179 = vmatmul.mubr.f32.gmra.mrb[0].mxu0 %v58
  %v180 = vpop.f32.mrb[0].mxu0
  %v181 = vadd.f32 0.0, %v180
  %v182 = vpop.f32.mrb[0].mxu0
  %183 = vmatprep.mubr.f32.mxu0 0.0
  %184 = vmatmul.mubr.f32.gmra.mrb[0].mxu0 %v59
  %v185 = vpop.f32.mrb[0].mxu0
  %v186 = vadd.f32 0.0, %v185
  %v187 = vpop.f32.mrb[0].mxu0
  %188 = vmatprep.mubr.f32.mxu0 0.0
  %189 = vmatmul.mubr.f32.gmra.mrb[0].mxu0 %v60
  %v190 = vpop.f32.mrb[0].mxu0
  %v191 = vadd.f32 0.0, %v190
  %v192 = vpop.f32.mrb[0].mxu0
  %193 = vmatprep.mubr.f32.mxu0 0.0
  %194 = vmatmul.mubr.f32.gmra.mrb[0].mxu0 %v61
  %v195 = vpop.f32.mrb[0].mxu0
  %v196 = vadd.f32 0.0, %v195
  %v197 = vpop.f32.mrb[0].mxu0
  %198 = vmatprep.mubr.f32.mxu0 0.0
  %199 = vmatmul.mubr.f32.gmra.mrb[0].mxu0 %v62
  %v200 = vpop.f32.mrb[0].mxu0
  %v201 = vadd.f32 0.0, %v200
  %v202 = vpop.f32.mrb[0].mxu0
  %203 = vmatprep.mubr.f32.mxu0 0.0
  %204 = vmatmul.mubr.f32.gmra.mrb[0].mxu0 %v63
  %v205 = vpop.f32.mrb[0].mxu0
  %v206 = vadd.f32 0.0, %v205
  %v207 = vpop.f32.mrb[0].mxu0
  %208 = vmatprep.mubr.f32.mxu0 0.0
  %209 = vmatmul.mubr.f32.gmra.mrb[0].mxu0 %v64
  %v210 = vpop.f32.mrb[0].mxu0
  %v211 = vadd.f32 0.0, %v210
  %v212 = vpop.f32.mrb[0].mxu0
  %213 = vmatprep.mubr.f32.mxu0 0.0
  %214 = vmatmul.mubr.f32.gmra.mrb[0].mxu0 %v65
  %v215 = vpop.f32.mrb[0].mxu0
  %v216 = vadd.f32 0.0, %v215
  %v217 = vpop.f32.mrb[0].mxu0
  %218 = vmatprep.mubr.f32.mxu0 0.0
  %219 = vmatmul.mubr.f32.gmra.mrb[0].mxu0 %v66
  %v220 = vpop.f32.mrb[0].mxu0
  %v221 = vadd.f32 0.0, %v220
  %v222 = vpop.f32.mrb[0].mxu0
  %223 = vmatprep.mubr.f32.mxu0 0.0
  %224 = vmatmul.mubr.f32.gmra.mrb[0].mxu0 %v67
  %v225 = vpop.f32.mrb[0].mxu0
  %v226 = vadd.f32 0.0, %v225
  %v227 = vpop.f32.mrb[0].mxu0
  %228 = vdwg.mxu0
  %v229 = vadd.f32 %v36, %v151
  %v230 = vadd.f32 %v37, %v156
  %v231 = vadd.f32 %v38, %v161
  %v232 = vadd.f32 %v39, %v166
  %v233 = vadd.f32 %v40, %v171
  %v234 = vadd.f32 %v41, %v176
  %v235 = vadd.f32 %v42, %v181
  %v236 = vadd.f32 %v43, %v186
  %v237 = vadd.f32 %v44, %v191
  %v238 = vadd.f32 %v45, %v196
  %v239 = vadd.f32 %v46, %v201
  %v240 = vadd.f32 %v47, %v206
  %v241 = vadd.f32 %v48, %v211
  %v242 = vadd.f32 %v49, %v216
  %v243 = vadd.f32 %v50, %v221
  %v244 = vadd.f32 %v51, %v226
  %245 = vst [vmem:[#allocation2] sm:$0xff] %v229
  %246 = vst [vmem:[#allocation2 + $0x8] sm:$0xff] %v230
  %247 = vst [vmem:[#allocation2 + $0x10] sm:$0xff] %v231
  %248 = vst [vmem:[#allocation2 + $0x18] sm:$0xff] %v232
  %249 = vst [vmem:[#allocation2 + $0x20] sm:$0xff] %v233
  %250 = vst [vmem:[#allocation2 + $0x28] sm:$0xff] %v234
  %251 = vst [vmem:[#allocation2 + $0x30] sm:$0xff] %v235
  %252 = vst [vmem:[#allocation2 + $0x38] sm:$0xff] %v236
  %253 = vst [vmem:[#allocation2 + $0x40] sm:$0xff] %v237
  %254 = vst [vmem:[#allocation2 + $0x48] sm:$0xff] %v238
  %255 = vst [vmem:[#allocation2 + $0x50] sm:$0xff] %v239
  %256 = vst [vmem:[#allocation2 + $0x58] sm:$0xff] %v240
  %257 = vst [vmem:[#allocation2 + $0x60] sm:$0xff] %v241
  %258 = vst [vmem:[#allocation2 + $0x68] sm:$0xff] %v242
  %259 = vst [vmem:[#allocation2 + $0x70] sm:$0xff] %v243
  %260 = vst [vmem:[#allocation2 + $0x78] sm:$0xff] %v244
  // Predicated region
  $region18: #{_gclip_forward.14} parent=0 // pred_check
    %p261 = pneg %p16
  $region19: #{_gclip_forward.14} parent=0 // pred_check_branch
    %263 = sbr.rel (%p261) target = $region21
  $region20: #{_gclip_forward.14} parent=0 // pred_region
    %v264 = vld [vmem:[#allocation2] sm:$0xff]
    %v265 = vld [vmem:[#allocation2 + $0x8] sm:$0xff]
    %v266 = vld [vmem:[#allocation2 + $0x10] sm:$0xff]
    %v267 = vld [vmem:[#allocation2 + $0x18] sm:$0xff]
    %v268 = vld [vmem:[#allocation2 + $0x20] sm:$0xff]
    %v269 = vld [vmem:[#allocation2 + $0x28] sm:$0xff]
    %v270 = vld [vmem:[#allocation2 + $0x30] sm:$0xff]
    %v271 = vld [vmem:[#allocation2 + $0x38] sm:$0xff]
    %v272 = vld [vmem:[#allocation2 + $0x40] sm:$0xff]
    %v273 = vld [vmem:[#allocation2 + $0x48] sm:$0xff]
    %v274 = vld [vmem:[#allocation2 + $0x50] sm:$0xff]
    %v275 = vld [vmem:[#allocation2 + $0x58] sm:$0xff]
    %v276 = vld [vmem:[#allocation2 + $0x60] sm:$0xff]
    %v277 = vld [vmem:[#allocation2 + $0x68] sm:$0xff]
    %v278 = vld [vmem:[#allocation2 + $0x70] sm:$0xff]
    %v279 = vld [vmem:[#allocation2 + $0x78] sm:$0xff]
    %v280 = vld [vmem:[%s2] sm:$0x1]
    %v282 = vlaneseq
    %v283 = vshrl.u32 %v282, 7
    %v284 = vsub.s32 0, %v283
    %v285 = vrot.slane %v280, %v284
    %v287 = vadd.f32 %v264, %v285
    %v288 = vadd.f32 %v265, %v285
    %v289 = vadd.f32 %v266, %v285
    %v290 = vadd.f32 %v267, %v285
    %v291 = vadd.f32 %v268, %v285
    %v292 = vadd.f32 %v269, %v285
    %v293 = vadd.f32 %v270, %v285
    %v294 = vadd.f32 %v271, %v285
    %v295 = vadd.f32 %v272, %v285
    %v296 = vadd.f32 %v273, %v285
    %v297 = vadd.f32 %v274, %v285
    %v298 = vadd.f32 %v275, %v285
    %v299 = vadd.f32 %v276, %v285
    %v300 = vadd.f32 %v277, %v285
    %v301 = vadd.f32 %v278, %v285
    %v302 = vadd.f32 %v279, %v285
    %v303 = vmax.f32 %v287, 0.0
    %v304 = vmax.f32 %v288, 0.0
    %v305 = vmax.f32 %v289, 0.0
    %v306 = vmax.f32 %v290, 0.0
    %v307 = vmax.f32 %v291, 0.0
    %v308 = vmax.f32 %v292, 0.0
    %v309 = vmax.f32 %v293, 0.0
    %v310 = vmax.f32 %v294, 0.0
    %v311 = vmax.f32 %v295, 0.0
    %v312 = vmax.f32 %v296, 0.0
    %v313 = vmax.f32 %v297, 0.0
    %v314 = vmax.f32 %v298, 0.0
    %v315 = vmax.f32 %v299, 0.0
    %v316 = vmax.f32 %v300, 0.0
    %v317 = vmax.f32 %v301, 0.0
    %v318 = vmax.f32 %v302, 0.0
    %319 = vst [vmem:[%s3] sm:$0xff] %v303
    %320 = vst [vmem:[%s3 + $0x8] sm:$0xff] %v304
    %321 = vst [vmem:[%s3 + $0x10] sm:$0xff] %v305
    %322 = vst [vmem:[%s3 + $0x18] sm:$0xff] %v306
    %323 = vst [vmem:[%s3 + $0x20] sm:$0xff] %v307
    %324 = vst [vmem:[%s3 + $0x28] sm:$0xff] %v308
    %325 = vst [vmem:[%s3 + $0x30] sm:$0xff] %v309
    %326 = vst [vmem:[%s3 + $0x38] sm:$0xff] %v310
    %327 = vst [vmem:[%s3 + $0x40] sm:$0xff] %v311
    %328 = vst [vmem:[%s3 + $0x48] sm:$0xff] %v312
    %329 = vst [vmem:[%s3 + $0x50] sm:$0xff] %v313
    %330 = vst [vmem:[%s3 + $0x58] sm:$0xff] %v314
    %331 = vst [vmem:[%s3 + $0x60] sm:$0xff] %v315
    %332 = vst [vmem:[%s3 + $0x68] sm:$0xff] %v316
    %333 = vst [vmem:[%s3 + $0x70] sm:$0xff] %v317
    %334 = vst [vmem:[%s3 + $0x78] sm:$0xff] %v318
    %v335 = vmul.f32 %v303, %v303
    %v336 = vmul.f32 %v304, %v304
    %v337 = vmul.f32 %v305, %v305
    %v338 = vmul.f32 %v306, %v306
    %v339 = vmul.f32 %v307, %v307
    %v340 = vmul.f32 %v308, %v308
    %v341 = vmul.f32 %v309, %v309
    %v342 = vmul.f32 %v310, %v310
    %v343 = vmul.f32 %v311, %v311
    %v344 = vmul.f32 %v312, %v312
    %v345 = vmul.f32 %v313, %v313
    %v346 = vmul.f32 %v314, %v314
    %v347 = vmul.f32 %v315, %v315
    %v348 = vmul.f32 %v316, %v316
    %v349 = vmul.f32 %v317, %v317
    %v350 = vmul.f32 %v318, %v318
    %351 = vadd.xlane.f32.xlu0 %v335
    %v352 = vpop.xlane.xlu0 %351
    %353 = vadd.xlane.f32.xlu0 %v336
    %v354 = vpop.xlane.xlu0 %353
    %355 = vadd.xlane.f32.xlu0 %v337
    %v356 = vpop.xlane.xlu0 %355
    %357 = vadd.xlane.f32.xlu0 %v338
    %v358 = vpop.xlane.xlu0 %357
    %359 = vadd.xlane.f32.xlu0 %v339
    %v360 = vpop.xlane.xlu0 %359
    %361 = vadd.xlane.f32.xlu0 %v340
    %v362 = vpop.xlane.xlu0 %361
    %363 = vadd.xlane.f32.xlu0 %v341
    %v364 = vpop.xlane.xlu0 %363
    %365 = vadd.xlane.f32.xlu0 %v342
    %v366 = vpop.xlane.xlu0 %365
    %367 = vadd.xlane.f32.xlu0 %v343
    %v368 = vpop.xlane.xlu0 %367
    %369 = vadd.xlane.f32.xlu0 %v344
    %v370 = vpop.xlane.xlu0 %369
    %371 = vadd.xlane.f32.xlu0 %v345
    %v372 = vpop.xlane.xlu0 %371
    %373 = vadd.xlane.f32.xlu0 %v346
    %v374 = vpop.xlane.xlu0 %373
    %375 = vadd.xlane.f32.xlu0 %v347
    %v376 = vpop.xlane.xlu0 %375
    %377 = vadd.xlane.f32.xlu0 %v348
    %v378 = vpop.xlane.xlu0 %377
    %379 = vadd.xlane.f32.xlu0 %v349
    %v380 = vpop.xlane.xlu0 %379
    %381 = vadd.xlane.f32.xlu0 %v350
    %v382 = vpop.xlane.xlu0 %381
    %v383 = vadd.f32 %v352, 1e-12
    %v384 = vadd.f32 %v354, 1e-12
    %v385 = vadd.f32 %v356, 1e-12
    %v386 = vadd.f32 %v358, 1e-12
    %v387 = vadd.f32 %v360, 1e-12
    %v388 = vadd.f32 %v362, 1e-12
    %v389 = vadd.f32 %v364, 1e-12
    %v390 = vadd.f32 %v366, 1e-12
    %v391 = vadd.f32 %v368, 1e-12
    %v392 = vadd.f32 %v370, 1e-12
    %v393 = vadd.f32 %v372, 1e-12
    %v394 = vadd.f32 %v374, 1e-12
    %v395 = vadd.f32 %v376, 1e-12
    %v396 = vadd.f32 %v378, 1e-12
    %v397 = vadd.f32 %v380, 1e-12
    %v398 = vadd.f32 %v382, 1e-12
    %v399 = vrsqrt.pop %v383
    %v400 = vrsqrt.pop %v384
    %v401 = vrsqrt.pop %v385
    %v402 = vrsqrt.pop %v386
    %v403 = vrsqrt.pop %v387
    %v404 = vrsqrt.pop %v388
    %v405 = vrsqrt.pop %v389
    %v406 = vrsqrt.pop %v390
    %v407 = vrsqrt.pop %v391
    %v408 = vrsqrt.pop %v392
    %v409 = vrsqrt.pop %v393
    %v410 = vrsqrt.pop %v394
    %v411 = vrsqrt.pop %v395
    %v412 = vrsqrt.pop %v396
    %v413 = vrsqrt.pop %v397
    %v414 = vrsqrt.pop %v398
    %v415 = vmul.f32 %v303, %v399
    %v416 = vmul.f32 %v304, %v400
    %v417 = vmul.f32 %v305, %v401
    %v418 = vmul.f32 %v306, %v402
    %v419 = vmul.f32 %v307, %v403
    %v420 = vmul.f32 %v308, %v404
    %v421 = vmul.f32 %v309, %v405
    %v422 = vmul.f32 %v310, %v406
    %v423 = vmul.f32 %v311, %v407
    %v424 = vmul.f32 %v312, %v408
    %v425 = vmul.f32 %v313, %v409
    %v426 = vmul.f32 %v314, %v410
    %v427 = vmul.f32 %v315, %v411
    %v428 = vmul.f32 %v316, %v412
    %v429 = vmul.f32 %v317, %v413
    %v430 = vmul.f32 %v318, %v414
    %431 = vst [vmem:[%s4] sm:$0xff] %v415
    %432 = vst [vmem:[%s4 + $0x8] sm:$0xff] %v416
    %433 = vst [vmem:[%s4 + $0x10] sm:$0xff] %v417
    %434 = vst [vmem:[%s4 + $0x18] sm:$0xff] %v418
    %435 = vst [vmem:[%s4 + $0x20] sm:$0xff] %v419
    %436 = vst [vmem:[%s4 + $0x28] sm:$0xff] %v420
    %437 = vst [vmem:[%s4 + $0x30] sm:$0xff] %v421
    %438 = vst [vmem:[%s4 + $0x38] sm:$0xff] %v422
    %439 = vst [vmem:[%s4 + $0x40] sm:$0xff] %v423
    %440 = vst [vmem:[%s4 + $0x48] sm:$0xff] %v424
    %441 = vst [vmem:[%s4 + $0x50] sm:$0xff] %v425
    %442 = vst [vmem:[%s4 + $0x58] sm:$0xff] %v426
    %443 = vst [vmem:[%s4 + $0x60] sm:$0xff] %v427
    %444 = vst [vmem:[%s4 + $0x68] sm:$0xff] %v428
    %445 = vst [vmem:[%s4 + $0x70] sm:$0xff] %v429
    %446 = vst [vmem:[%s4 + $0x78] sm:$0xff] %v430
  $region21: #{_gclip_forward.14} parent=0 // pred_fallthru
    _
  // Predicated region
  $region22: #{_gclip_forward.14} parent=0 // pred_check
    _
  $region23: #{_gclip_forward.14} parent=0 // pred_check_branch
    %448 = sbr.rel (0) target = $region25
  $region24: #{_gclip_forward.14} parent=0 // pred_region
    _
  $region25: #{_gclip_forward.14} parent=0 // pred_fallthru
    _
  // Predicated region
  $region26: #{_gclip_forward.14} parent=0 // pred_check
    _
  $region27: #{_gclip_forward.14} parent=0 // pred_check_branch
    %450 = sbr.rel (0) target = $region29
  $region28: #{_gclip_forward.14} parent=0 // pred_region
    _
  $region29: #{_gclip_forward.14} parent=0 // pred_fallthru
    _
  // Predicated region
  $region30: #{_gclip_forward.14} parent=0 // pred_check
    _
  $region31: #{_gclip_forward.14} parent=0 // pred_check_branch
    %452 = sbr.rel (0) target = $region33
  $region32: #{_gclip_forward.14} parent=0 // pred_region
    _
  $region33: #{_gclip_forward.14} parent=0 // pred_fallthru
    _
  // Predicated region
  $region34: #{_gclip_forward.14} parent=0 // pred_check
    _
  $region35: #{_gclip_forward.14} parent=0 // pred_check_branch
    %454 = sbr.rel (0) target = $region37
  $region36: #{_gclip_forward.14} parent=0 // pred_region
    _
  $region37: #{_gclip_forward.14} parent=0 // pred_fallthru
    _

// kernel: _gclip_forward.21
$region0: #{_gclip_forward.21}
  #allocation0 [shape = 'u32[]', space=smem, size = 0x4, offset = 0x4, fixed_abs, tag = 'smem constant byte address 0x4 - core index']
  #allocation1 [shape = 'u32[144,128]{1,0:T(1,128)}', space=vmem, size = 0x12000, scoped, tag = 'internal scratch']
  %s0 = inlined_call_operand.vmem [shape: f32[128,256], index: 0, kind: input, shape index: {}]
  %s1 = inlined_call_operand.vmem [shape: f32[256,128], index: 1, kind: input, shape index: {}]
  %s2 = inlined_call_operand.vmem [shape: f32[128,128], index: 2, kind: input, shape index: {}]
  %s3 = inlined_call_operand.vmem [shape: f32[1,128], index: 3, kind: input, shape index: {}]
  %s4 = inlined_call_operand.vmem [shape: f32[128,128], index: 4, kind: input, shape index: {}]
  %s5 = inlined_call_operand.vmem [shape: f32[1,128], index: 5, kind: input, shape index: {}]
  %s6 = inlined_call_operand.vmem [shape: f32[128,128], index: 6, kind: output, shape index: {}]
  %s7 = sld [smem:[#allocation0]]
  $region34: #{_gclip_forward.21} parent=0
    _
  %s9 = ssub.s32 1, %s7
  %s10 = scalar_select 0, %s9, %s7
  // Predicated region
  $region2: #{_gclip_forward.21} parent=0 // pred_check
    _
  $region3: #{_gclip_forward.21} parent=0 // pred_check_branch
    %12 = sbr.rel (0) target = $region5
  $region4: #{_gclip_forward.21} parent=0 // pred_region
    _
  $region5: #{_gclip_forward.21} parent=0 // pred_fallthru
    _
  // Predicated region
  $region6: #{_gclip_forward.21} parent=0 // pred_check
    _
  $region7: #{_gclip_forward.21} parent=0 // pred_check_branch
    %14 = sbr.rel (0) target = $region9
  $region8: #{_gclip_forward.21} parent=0 // pred_region
    _
  $region9: #{_gclip_forward.21} parent=0 // pred_fallthru
    _
  // Predicated region
  $region10: #{_gclip_forward.21} parent=0 // pred_check
    _
  $region11: #{_gclip_forward.21} parent=0 // pred_check_branch
    %16 = sbr.rel (0) target = $region13
  $region12: #{_gclip_forward.21} parent=0 // pred_region
    _
  $region13: #{_gclip_forward.21} parent=0 // pred_fallthru
    _
  // Predicated region
  $region14: #{_gclip_forward.21} parent=0 // pred_check
    _
  $region15: #{_gclip_forward.21} parent=0 // pred_check_branch
    %18 = sbr.rel (0) target = $region17
  $region16: #{_gclip_forward.21} parent=0 // pred_region
    _
  $region17: #{_gclip_forward.21} parent=0 // pred_fallthru
    _
  // Predicated region
  $region18: #{_gclip_forward.21} parent=0 // pred_check
    _
  $region19: #{_gclip_forward.21} parent=0 // pred_check_branch
    %20 = sbr.rel (0) target = $region21
  $region20: #{_gclip_forward.21} parent=0 // pred_region
    _
  $region21: #{_gclip_forward.21} parent=0 // pred_fallthru
    _
  // Predicated region
  $region22: #{_gclip_forward.21} parent=0 // pred_check
    _
  $region23: #{_gclip_forward.21} parent=0 // pred_check_branch
    %22 = sbr.rel (0) target = $region25
  $region24: #{_gclip_forward.21} parent=0 // pred_region
    _
  $region25: #{_gclip_forward.21} parent=0 // pred_fallthru
    _
  %v23 = vld [vmem:[%s0] sm:$0xff]
  %v24 = vld [vmem:[%s0 + $0x8] sm:$0xff]
  %v25 = vld [vmem:[%s0 + $0x10] sm:$0xff]
  %v26 = vld [vmem:[%s0 + $0x18] sm:$0xff]
  %v27 = vld [vmem:[%s0 + $0x20] sm:$0xff]
  %v28 = vld [vmem:[%s0 + $0x28] sm:$0xff]
  %v29 = vld [vmem:[%s0 + $0x30] sm:$0xff]
  %v30 = vld [vmem:[%s0 + $0x38] sm:$0xff]
  %v31 = vld [vmem:[%s0 + $0x40] sm:$0xff]
  %v32 = vld [vmem:[%s0 + $0x48] sm:$0xff]
  %v33 = vld [vmem:[%s0 + $0x50] sm:$0xff]
  %v34 = vld [vmem:[%s0 + $0x58] sm:$0xff]
  %v35 = vld [vmem:[%s0 + $0x60] sm:$0xff]
  %v36 = vld [vmem:[%s0 + $0x68] sm:$0xff]
  %v37 = vld [vmem:[%s0 + $0x70] sm:$0xff]
  %v38 = vld [vmem:[%s0 + $0x78] sm:$0xff]
  %v39 = vld [vmem:[%s0 + $0x80] sm:$0xff]
  %v40 = vld [vmem:[%s0 + $0x88] sm:$0xff]
  %v41 = vld [vmem:[%s0 + $0x90] sm:$0xff]
  %v42 = vld [vmem:[%s0 + $0x98] sm:$0xff]
  %v43 = vld [vmem:[%s0 + $0xa0] sm:$0xff]
  %v44 = vld [vmem:[%s0 + $0xa8] sm:$0xff]
  %v45 = vld [vmem:[%s0 + $0xb0] sm:$0xff]
  %v46 = vld [vmem:[%s0 + $0xb8] sm:$0xff]
  %v47 = vld [vmem:[%s0 + $0xc0] sm:$0xff]
  %v48 = vld [vmem:[%s0 + $0xc8] sm:$0xff]
  %v49 = vld [vmem:[%s0 + $0xd0] sm:$0xff]
  %v50 = vld [vmem:[%s0 + $0xd8] sm:$0xff]
  %v51 = vld [vmem:[%s0 + $0xe0] sm:$0xff]
  %v52 = vld [vmem:[%s0 + $0xe8] sm:$0xff]
  %v53 = vld [vmem:[%s0 + $0xf0] sm:$0xff]
  %v54 = vld [vmem:[%s0 + $0xf8] sm:$0xff]
  %v55 = vld [vmem:[%s1] sm:$0xff]
  %v56 = vld [vmem:[%s1 + $0x8] sm:$0xff]
  %v57 = vld [vmem:[%s1 + $0x10] sm:$0xff]
  %v58 = vld [vmem:[%s1 + $0x18] sm:$0xff]
  %v59 = vld [vmem:[%s1 + $0x20] sm:$0xff]
  %v60 = vld [vmem:[%s1 + $0x28] sm:$0xff]
  %v61 = vld [vmem:[%s1 + $0x30] sm:$0xff]
  %v62 = vld [vmem:[%s1 + $0x38] sm:$0xff]
  %v63 = vld [vmem:[%s1 + $0x40] sm:$0xff]
  %v64 = vld [vmem:[%s1 + $0x48] sm:$0xff]
  %v65 = vld [vmem:[%s1 + $0x50] sm:$0xff]
  %v66 = vld [vmem:[%s1 + $0x58] sm:$0xff]
  %v67 = vld [vmem:[%s1 + $0x60] sm:$0xff]
  %v68 = vld [vmem:[%s1 + $0x68] sm:$0xff]
  %v69 = vld [vmem:[%s1 + $0x70] sm:$0xff]
  %v70 = vld [vmem:[%s1 + $0x78] sm:$0xff]
  %v71 = vld [vmem:[%s1 + $0x80] sm:$0xff]
  %v72 = vld [vmem:[%s1 + $0x88] sm:$0xff]
  %v73 = vld [vmem:[%s1 + $0x90] sm:$0xff]
  %v74 = vld [vmem:[%s1 + $0x98] sm:$0xff]
  %v75 = vld [vmem:[%s1 + $0xa0] sm:$0xff]
  %v76 = vld [vmem:[%s1 + $0xa8] sm:$0xff]
  %v77 = vld [vmem:[%s1 + $0xb0] sm:$0xff]
  %v78 = vld [vmem:[%s1 + $0xb8] sm:$0xff]
  %v79 = vld [vmem:[%s1 + $0xc0] sm:$0xff]
  %v80 = vld [vmem:[%s1 + $0xc8] sm:$0xff]
  %v81 = vld [vmem:[%s1 + $0xd0] sm:$0xff]
  %v82 = vld [vmem:[%s1 + $0xd8] sm:$0xff]
  %v83 = vld [vmem:[%s1 + $0xe0] sm:$0xff]
  %v84 = vld [vmem:[%s1 + $0xe8] sm:$0xff]
  %v85 = vld [vmem:[%s1 + $0xf0] sm:$0xff]
  %v86 = vld [vmem:[%s1 + $0xf8] sm:$0xff]
  %87 = vmatprep.subr.mxu0 0.0
  %88 = vmatpush1.msra.mxu0 %v55
  %89 = vmatprep.subr.mxu0 0.0
  %90 = vmatpush1.msra.mxu0 %v56
  %91 = vmatprep.subr.mxu0 0.0
  %92 = vmatpush1.msra.mxu0 %v57
  %93 = vmatprep.subr.mxu0 0.0
  %94 = vmatpush1.msra.mxu0 %v58
  %95 = vmatprep.subr.mxu0 0.0
  %96 = vmatpush1.msra.mxu0 %v59
  %97 = vmatprep.subr.mxu0 0.0
  %98 = vmatpush1.msra.mxu0 %v60
  %99 = vmatprep.subr.mxu0 0.0
  %100 = vmatpush1.msra.mxu0 %v61
  %101 = vmatprep.subr.mxu0 0.0
  %102 = vmatpush1.msra.mxu0 %v62
  %103 = vmatprep.subr.mxu0 0.0
  %104 = vmatpush1.msra.mxu0 %v63
  %105 = vmatprep.subr.mxu0 0.0
  %106 = vmatpush1.msra.mxu0 %v64
  %107 = vmatprep.subr.mxu0 0.0
  %108 = vmatpush1.msra.mxu0 %v65
  %109 = vmatprep.subr.mxu0 0.0
  %110 = vmatpush1.msra.mxu0 %v66
  %111 = vmatprep.subr.mxu0 0.0
  %112 = vmatpush1.msra.mxu0 %v67
  %113 = vmatprep.subr.mxu0 0.0
  %114 = vmatpush1.msra.mxu0 %v68
  %115 = vmatprep.subr.mxu0 0.0
  %116 = vmatpush1.msra.mxu0 %v69
  %117 = vmatprep.subr.mxu0 0.0
  %118 = vmatpush1.msra.mxu0 %v70
  %119 = vmatprep.subr.mxu0 0.0
  %120 = vmatpush1.msra.mxu0 %v71
  %121 = vmatprep.subr.mxu0 0.0
  %122 = vmatpush1.msra.mxu0 %v72
  %123 = vmatprep.subr.mxu0 0.0
  %124 = vmatpush1.msra.mxu0 %v73
  %125 = vmatprep.subr.mxu0 0.0
  %126 = vmatpush1.msra.mxu0 %v74
  %127 = vmatprep.subr.mxu0 0.0
  %128 = vmatpush1.msra.mxu0 %v75
  %129 = vmatprep.subr.mxu0 0.0
  %130 = vmatpush1.msra.mxu0 %v76
  %131 = vmatprep.subr.mxu0 0.0
  %132 = vmatpush1.msra.mxu0 %v77
  %133 = vmatprep.subr.mxu0 0.0
  %134 = vmatpush1.msra.mxu0 %v78
  %135 = vmatprep.subr.mxu0 0.0
  %136 = vmatpush1.msra.mxu0 %v79
  %137 = vmatprep.subr.mxu0 0.0
  %138 = vmatpush1.msra.mxu0 %v80
  %139 = vmatprep.subr.mxu0 0.0
  %140 = vmatpush1.msra.mxu0 %v81
  %141 = vmatprep.subr.mxu0 0.0
  %142 = vmatpush1.msra.mxu0 %v82
  %143 = vmatprep.subr.mxu0 0.0
  %144 = vmatpush1.msra.mxu0 %v83
  %145 = vmatprep.subr.mxu0 0.0
  %146 = vmatpush1.msra.mxu0 %v84
  %147 = vmatprep.subr.mxu0 0.0
  %148 = vmatpush1.msra.mxu0 %v85
  %149 = vmatprep.subr.mxu0 0.0
  %150 = vmatpush1.msra.mxu0 %v86
  %151 = vmatprep.mubr.f32.mxu0 %v24
  %152 = vmatmul.mubr.f32.gmra.mrb[0].mxu0 %v23
  %v153 = vpop.f32.mrb[0].mxu0
  %v154 = vadd.f32 0.0, %v153
  %v155 = vpop.f32.mrb[0].mxu0
  %156 = vmatprep.mubr.f32.mxu0 %v26
  %157 = vmatmul.mubr.f32.gmra.mrb[0].mxu0 %v25
  %v158 = vpop.f32.mrb[0].mxu0
  %v159 = vadd.f32 0.0, %v158
  %v160 = vpop.f32.mrb[0].mxu0
  %161 = vmatprep.mubr.f32.mxu0 %v28
  %162 = vmatmul.mubr.f32.gmra.mrb[0].mxu0 %v27
  %v163 = vpop.f32.mrb[0].mxu0
  %v164 = vadd.f32 0.0, %v163
  %v165 = vpop.f32.mrb[0].mxu0
  %166 = vmatprep.mubr.f32.mxu0 %v30
  %167 = vmatmul.mubr.f32.gmra.mrb[0].mxu0 %v29
  %v168 = vpop.f32.mrb[0].mxu0
  %v169 = vadd.f32 0.0, %v168
  %v170 = vpop.f32.mrb[0].mxu0
  %171 = vmatprep.mubr.f32.mxu0 %v32
  %172 = vmatmul.mubr.f32.gmra.mrb[0].mxu0 %v31
  %v173 = vpop.f32.mrb[0].mxu0
  %v174 = vadd.f32 0.0, %v173
  %v175 = vpop.f32.mrb[0].mxu0
  %176 = vmatprep.mubr.f32.mxu0 %v34
  %177 = vmatmul.mubr.f32.gmra.mrb[0].mxu0 %v33
  %v178 = vpop.f32.mrb[0].mxu0
  %v179 = vadd.f32 0.0, %v178
  %v180 = vpop.f32.mrb[0].mxu0
  %181 = vmatprep.mubr.f32.mxu0 %v36
  %182 = vmatmul.mubr.f32.gmra.mrb[0].mxu0 %v35
  %v183 = vpop.f32.mrb[0].mxu0
  %v184 = vadd.f32 0.0, %v183
  %v185 = vpop.f32.mrb[0].mxu0
  %186 = vmatprep.mubr.f32.mxu0 %v38
  %187 = vmatmul.mubr.f32.gmra.mrb[0].mxu0 %v37
  %v188 = vpop.f32.mrb[0].mxu0
  %v189 = vadd.f32 0.0, %v188
  %v190 = vpop.f32.mrb[0].mxu0
  %191 = vmatprep.mubr.f32.mxu0 %v40
  %192 = vmatmul.mubr.f32.gmra.mrb[0].mxu0 %v39
  %v193 = vpop.f32.mrb[0].mxu0
  %v194 = vadd.f32 0.0, %v193
  %v195 = vpop.f32.mrb[0].mxu0
  %196 = vmatprep.mubr.f32.mxu0 %v42
  %197 = vmatmul.mubr.f32.gmra.mrb[0].mxu0 %v41
  %v198 = vpop.f32.mrb[0].mxu0
  %v199 = vadd.f32 0.0, %v198
  %v200 = vpop.f32.mrb[0].mxu0
  %201 = vmatprep.mubr.f32.mxu0 %v44
  %202 = vmatmul.mubr.f32.gmra.mrb[0].mxu0 %v43
  %v203 = vpop.f32.mrb[0].mxu0
  %v204 = vadd.f32 0.0, %v203
  %v205 = vpop.f32.mrb[0].mxu0
  %206 = vmatprep.mubr.f32.mxu0 %v46
  %207 = vmatmul.mubr.f32.gmra.mrb[0].mxu0 %v45
  %v208 = vpop.f32.mrb[0].mxu0
  %v209 = vadd.f32 0.0, %v208
  %v210 = vpop.f32.mrb[0].mxu0
  %211 = vmatprep.mubr.f32.mxu0 %v48
  %212 = vmatmul.mubr.f32.gmra.mrb[0].mxu0 %v47
  %v213 = vpop.f32.mrb[0].mxu0
  %v214 = vadd.f32 0.0, %v213
  %v215 = vpop.f32.mrb[0].mxu0
  %216 = vmatprep.mubr.f32.mxu0 %v50
  %217 = vmatmul.mubr.f32.gmra.mrb[0].mxu0 %v49
  %v218 = vpop.f32.mrb[0].mxu0
  %v219 = vadd.f32 0.0, %v218
  %v220 = vpop.f32.mrb[0].mxu0
  %221 = vmatprep.mubr.f32.mxu0 %v52
  %222 = vmatmul.mubr.f32.gmra.mrb[0].mxu0 %v51
  %v223 = vpop.f32.mrb[0].mxu0
  %v224 = vadd.f32 0.0, %v223
  %v225 = vpop.f32.mrb[0].mxu0
  %226 = vmatprep.mubr.f32.mxu0 %v54
  %227 = vmatmul.mubr.f32.gmra.mrb[0].mxu0 %v53
  %v228 = vpop.f32.mrb[0].mxu0
  %v229 = vadd.f32 0.0, %v228
  %v230 = vpop.f32.mrb[0].mxu0
  %231 = vdwg.mxu0
  %v232 = vld [vmem:[%s2] sm:$0xff]
  %v233 = vld [vmem:[%s2 + $0x8] sm:$0xff]
  %v234 = vld [vmem:[%s2 + $0x10] sm:$0xff]
  %v235 = vld [vmem:[%s2 + $0x18] sm:$0xff]
  %v236 = vld [vmem:[%s2 + $0x20] sm:$0xff]
  %v237 = vld [vmem:[%s2 + $0x28] sm:$0xff]
  %v238 = vld [vmem:[%s2 + $0x30] sm:$0xff]
  %v239 = vld [vmem:[%s2 + $0x38] sm:$0xff]
  %v240 = vld [vmem:[%s2 + $0x40] sm:$0xff]
  %v241 = vld [vmem:[%s2 + $0x48] sm:$0xff]
  %v242 = vld [vmem:[%s2 + $0x50] sm:$0xff]
  %v243 = vld [vmem:[%s2 + $0x58] sm:$0xff]
  %v244 = vld [vmem:[%s2 + $0x60] sm:$0xff]
  %v245 = vld [vmem:[%s2 + $0x68] sm:$0xff]
  %v246 = vld [vmem:[%s2 + $0x70] sm:$0xff]
  %v247 = vld [vmem:[%s2 + $0x78] sm:$0xff]
  %v248 = vld [vmem:[%s3] sm:$0x1]
  %v250 = vlaneseq
  %v251 = vshrl.u32 %v250, 7
  %v252 = vsub.s32 0, %v251
  %v253 = vrot.slane %v248, %v252
  %255 = vmatprep.subr.mxu0 0.0
  %256 = vmatpush1.msra.mxu0 %v232
  %257 = vmatprep.subr.mxu0 0.0
  %258 = vmatpush1.msra.mxu0 %v233
  %259 = vmatprep.subr.mxu0 0.0
  %260 = vmatpush1.msra.mxu0 %v234
  %261 = vmatprep.subr.mxu0 0.0
  %262 = vmatpush1.msra.mxu0 %v235
  %263 = vmatprep.subr.mxu0 0.0
  %264 = vmatpush1.msra.mxu0 %v236
  %265 = vmatprep.subr.mxu0 0.0
  %266 = vmatpush1.msra.mxu0 %v237
  %267 = vmatprep.subr.mxu0 0.0
  %268 = vmatpush1.msra.mxu0 %v238
  %269 = vmatprep.subr.mxu0 0.0
  %270 = vmatpush1.msra.mxu0 %v239
  %271 = vmatprep.subr.mxu0 0.0
  %272 = vmatpush1.msra.mxu0 %v240
  %273 = vmatprep.subr.mxu0 0.0
  %274 = vmatpush1.msra.mxu0 %v241
  %275 = vmatprep.subr.mxu0 0.0
  %276 = vmatpush1.msra.mxu0 %v242
  %277 = vmatprep.subr.mxu0 0.0
  %278 = vmatpush1.msra.mxu0 %v243
  %279 = vmatprep.subr.mxu0 0.0
  %280 = vmatpush1.msra.mxu0 %v244
  %281 = vmatprep.subr.mxu0 0.0
  %282 = vmatpush1.msra.mxu0 %v245
  %283 = vmatprep.subr.mxu0 0.0
  %284 = vmatpush1.msra.mxu0 %v246
  %285 = vmatprep.subr.mxu0 0.0
  %286 = vmatpush1.msra.mxu0 %v247
  %287 = vmatprep.subr.mxu0 0.0
  %288 = vmatpush1.msra.mxu0 0.0
  %289 = vmatprep.subr.mxu0 0.0
  %290 = vmatpush1.msra.mxu0 0.0
  %291 = vmatprep.subr.mxu0 0.0
  %292 = vmatpush1.msra.mxu0 0.0
  %293 = vmatprep.subr.mxu0 0.0
  %294 = vmatpush1.msra.mxu0 0.0
  %295 = vmatprep.subr.mxu0 0.0
  %296 = vmatpush1.msra.mxu0 0.0
  %297 = vmatprep.subr.mxu0 0.0
  %298 = vmatpush1.msra.mxu0 0.0
  %299 = vmatprep.subr.mxu0 0.0
  %300 = vmatpush1.msra.mxu0 0.0
  %301 = vmatprep.subr.mxu0 0.0
  %302 = vmatpush1.msra.mxu0 0.0
  %303 = vmatprep.subr.mxu0 0.0
  %304 = vmatpush1.msra.mxu0 0.0
  %305 = vmatprep.subr.mxu0 0.0
  %306 = vmatpush1.msra.mxu0 0.0
  %307 = vmatprep.subr.mxu0 0.0
  %308 = vmatpush1.msra.mxu0 0.0
  %309 = vmatprep.subr.mxu0 0.0
  %310 = vmatpush1.msra.mxu0 0.0
  %311 = vmatprep.subr.mxu0 0.0
  %312 = vmatpush1.msra.mxu0 0.0
  %313 = vmatprep.subr.mxu0 0.0
  %314 = vmatpush1.msra.mxu0 0.0
  %315 = vmatprep.subr.mxu0 0.0
  %316 = vmatpush1.msra.mxu0 0.0
  %317 = vmatprep.subr.mxu0 0.0
  %318 = vmatpush1.msra.mxu0 0.0
  %319 = vmatprep.mubr.f32.mxu0 0.0
  %320 = vmatmul.mubr.f32.gmra.mrb[0].mxu0 %v154
  %v321 = vpop.f32.mrb[0].mxu0
  %v322 = vadd.f32 %v253, %v321
  %v323 = vpop.f32.mrb[0].mxu0
  %324 = vmatprep.mubr.f32.mxu0 0.0
  %325 = vmatmul.mubr.f32.gmra.mrb[0].mxu0 %v159
  %v326 = vpop.f32.mrb[0].mxu0
  %v327 = vadd.f32 %v253, %v326
  %v328 = vpop.f32.mrb[0].mxu0
  %329 = vmatprep.mubr.f32.mxu0 0.0
  %330 = vmatmul.mubr.f32.gmra.mrb[0].mxu0 %v164
  %v331 = vpop.f32.mrb[0].mxu0
  %v332 = vadd.f32 %v253, %v331
  %v333 = vpop.f32.mrb[0].mxu0
  %334 = vmatprep.mubr.f32.mxu0 0.0
  %335 = vmatmul.mubr.f32.gmra.mrb[0].mxu0 %v169
  %v336 = vpop.f32.mrb[0].mxu0
  %v337 = vadd.f32 %v253, %v336
  %v338 = vpop.f32.mrb[0].mxu0
  %339 = vmatprep.mubr.f32.mxu0 0.0
  %340 = vmatmul.mubr.f32.gmra.mrb[0].mxu0 %v174
  %v341 = vpop.f32.mrb[0].mxu0
  %v342 = vadd.f32 %v253, %v341
  %v343 = vpop.f32.mrb[0].mxu0
  %344 = vmatprep.mubr.f32.mxu0 0.0
  %345 = vmatmul.mubr.f32.gmra.mrb[0].mxu0 %v179
  %v346 = vpop.f32.mrb[0].mxu0
  %v347 = vadd.f32 %v253, %v346
  %v348 = vpop.f32.mrb[0].mxu0
  %349 = vmatprep.mubr.f32.mxu0 0.0
  %350 = vmatmul.mubr.f32.gmra.mrb[0].mxu0 %v184
  %v351 = vpop.f32.mrb[0].mxu0
  %v352 = vadd.f32 %v253, %v351
  %v353 = vpop.f32.mrb[0].mxu0
  %354 = vmatprep.mubr.f32.mxu0 0.0
  %355 = vmatmul.mubr.f32.gmra.mrb[0].mxu0 %v189
  %v356 = vpop.f32.mrb[0].mxu0
  %v357 = vadd.f32 %v253, %v356
  %v358 = vpop.f32.mrb[0].mxu0
  %359 = vmatprep.mubr.f32.mxu0 0.0
  %360 = vmatmul.mubr.f32.gmra.mrb[0].mxu0 %v194
  %v361 = vpop.f32.mrb[0].mxu0
  %v362 = vadd.f32 %v253, %v361
  %v363 = vpop.f32.mrb[0].mxu0
  %364 = vmatprep.mubr.f32.mxu0 0.0
  %365 = vmatmul.mubr.f32.gmra.mrb[0].mxu0 %v199
  %v366 = vpop.f32.mrb[0].mxu0
  %v367 = vadd.f32 %v253, %v366
  %v368 = vpop.f32.mrb[0].mxu0
  %369 = vmatprep.mubr.f32.mxu0 0.0
  %370 = vmatmul.mubr.f32.gmra.mrb[0].mxu0 %v204
  %v371 = vpop.f32.mrb[0].mxu0
  %v372 = vadd.f32 %v253, %v371
  %v373 = vpop.f32.mrb[0].mxu0
  %374 = vmatprep.mubr.f32.mxu0 0.0
  %375 = vmatmul.mubr.f32.gmra.mrb[0].mxu0 %v209
  %v376 = vpop.f32.mrb[0].mxu0
  %v377 = vadd.f32 %v253, %v376
  %v378 = vpop.f32.mrb[0].mxu0
  %379 = vmatprep.mubr.f32.mxu0 0.0
  %380 = vmatmul.mubr.f32.gmra.mrb[0].mxu0 %v214
  %v381 = vpop.f32.mrb[0].mxu0
  %v382 = vadd.f32 %v253, %v381
  %v383 = vpop.f32.mrb[0].mxu0
  %384 = vmatprep.mubr.f32.mxu0 0.0
  %385 = vmatmul.mubr.f32.gmra.mrb[0].mxu0 %v219
  %v386 = vpop.f32.mrb[0].mxu0
  %v387 = vadd.f32 %v253, %v386
  %v388 = vpop.f32.mrb[0].mxu0
  %389 = vmatprep.mubr.f32.mxu0 0.0
  %390 = vmatmul.mubr.f32.gmra.mrb[0].mxu0 %v224
  %v391 = vpop.f32.mrb[0].mxu0
  %v392 = vadd.f32 %v253, %v391
  %v393 = vpop.f32.mrb[0].mxu0
  %394 = vmatprep.mubr.f32.mxu0 0.0
  %395 = vmatmul.mubr.f32.gmra.mrb[0].mxu0 %v229
  %v396 = vpop.f32.mrb[0].mxu0
  %v397 = vadd.f32 %v253, %v396
  %v398 = vpop.f32.mrb[0].mxu0
  %399 = vdwg.mxu0
  %v400 = vld [vmem:[%s4] sm:$0xff]
  %v401 = vld [vmem:[%s4 + $0x8] sm:$0xff]
  %v402 = vld [vmem:[%s4 + $0x10] sm:$0xff]
  %v403 = vld [vmem:[%s4 + $0x18] sm:$0xff]
  %v404 = vld [vmem:[%s4 + $0x20] sm:$0xff]
  %v405 = vld [vmem:[%s4 + $0x28] sm:$0xff]
  %v406 = vld [vmem:[%s4 + $0x30] sm:$0xff]
  %v407 = vld [vmem:[%s4 + $0x38] sm:$0xff]
  %v408 = vld [vmem:[%s4 + $0x40] sm:$0xff]
  %v409 = vld [vmem:[%s4 + $0x48] sm:$0xff]
  %v410 = vld [vmem:[%s4 + $0x50] sm:$0xff]
  %v411 = vld [vmem:[%s4 + $0x58] sm:$0xff]
  %v412 = vld [vmem:[%s4 + $0x60] sm:$0xff]
  %v413 = vld [vmem:[%s4 + $0x68] sm:$0xff]
  %v414 = vld [vmem:[%s4 + $0x70] sm:$0xff]
  %v415 = vld [vmem:[%s4 + $0x78] sm:$0xff]
  %v416 = vld [vmem:[%s5] sm:$0x1]
  %v418 = vlaneseq
  %v419 = vshrl.u32 %v418, 7
  %v420 = vsub.s32 0, %v419
  %v421 = vrot.slane %v416, %v420
  %423 = vmatprep.subr.mxu0 0.0
  %424 = vmatpush1.msra.mxu0 %v400
  %425 = vmatprep.subr.mxu0 0.0
  %426 = vmatpush1.msra.mxu0 %v401
  %427 = vmatprep.subr.mxu0 0.0
  %428 = vmatpush1.msra.mxu0 %v402
  %429 = vmatprep.subr.mxu0 0.0
  %430 = vmatpush1.msra.mxu0 %v403
  %431 = vmatprep.subr.mxu0 0.0
  %432 = vmatpush1.msra.mxu0 %v404
  %433 = vmatprep.subr.mxu0 0.0
  %434 = vmatpush1.msra.mxu0 %v405
  %435 = vmatprep.subr.mxu0 0.0
  %436 = vmatpush1.msra.mxu0 %v406
  %437 = vmatprep.subr.mxu0 0.0
  %438 = vmatpush1.msra.mxu0 %v407
  %439 = vmatprep.subr.mxu0 0.0
  %440 = vmatpush1.msra.mxu0 %v408
  %441 = vmatprep.subr.mxu0 0.0
  %442 = vmatpush1.msra.mxu0 %v409
  %443 = vmatprep.subr.mxu0 0.0
  %444 = vmatpush1.msra.mxu0 %v410
  %445 = vmatprep.subr.mxu0 0.0
  %446 = vmatpush1.msra.mxu0 %v411
  %447 = vmatprep.subr.mxu0 0.0
  %448 = vmatpush1.msra.mxu0 %v412
  %449 = vmatprep.subr.mxu0 0.0
  %450 = vmatpush1.msra.mxu0 %v413
  %451 = vmatprep.subr.mxu0 0.0
  %452 = vmatpush1.msra.mxu0 %v414
  %453 = vmatprep.subr.mxu0 0.0
  %454 = vmatpush1.msra.mxu0 %v415
  %455 = vmatprep.subr.mxu0 0.0
  %456 = vmatpush1.msra.mxu0 0.0
  %457 = vmatprep.subr.mxu0 0.0
  %458 = vmatpush1.msra.mxu0 0.0
  %459 = vmatprep.subr.mxu0 0.0
  %460 = vmatpush1.msra.mxu0 0.0
  %461 = vmatprep.subr.mxu0 0.0
  %462 = vmatpush1.msra.mxu0 0.0
  %463 = vmatprep.subr.mxu0 0.0
  %464 = vmatpush1.msra.mxu0 0.0
  %465 = vmatprep.subr.mxu0 0.0
  %466 = vmatpush1.msra.mxu0 0.0
  %467 = vmatprep.subr.mxu0 0.0
  %468 = vmatpush1.msra.mxu0 0.0
  %469 = vmatprep.subr.mxu0 0.0
  %470 = vmatpush1.msra.mxu0 0.0
  %471 = vmatprep.subr.mxu0 0.0
  %472 = vmatpush1.msra.mxu0 0.0
  %473 = vmatprep.subr.mxu0 0.0
  %474 = vmatpush1.msra.mxu0 0.0
  %475 = vmatprep.subr.mxu0 0.0
  %476 = vmatpush1.msra.mxu0 0.0
  %477 = vmatprep.subr.mxu0 0.0
  %478 = vmatpush1.msra.mxu0 0.0
  %479 = vmatprep.subr.mxu0 0.0
  %480 = vmatpush1.msra.mxu0 0.0
  %481 = vmatprep.subr.mxu0 0.0
  %482 = vmatpush1.msra.mxu0 0.0
  %483 = vmatprep.subr.mxu0 0.0
  %484 = vmatpush1.msra.mxu0 0.0
  %485 = vmatprep.subr.mxu0 0.0
  %486 = vmatpush1.msra.mxu0 0.0
  %487 = vmatprep.mubr.f32.mxu0 0.0
  %488 = vmatmul.mubr.f32.gmra.mrb[0].mxu0 %v322
  %v489 = vpop.f32.mrb[0].mxu0
  %v490 = vadd.f32 %v421, %v489
  %v491 = vpop.f32.mrb[0].mxu0
  %492 = vmatprep.mubr.f32.mxu0 0.0
  %493 = vmatmul.mubr.f32.gmra.mrb[0].mxu0 %v327
  %v494 = vpop.f32.mrb[0].mxu0
  %v495 = vadd.f32 %v421, %v494
  %v496 = vpop.f32.mrb[0].mxu0
  %497 = vmatprep.mubr.f32.mxu0 0.0
  %498 = vmatmul.mubr.f32.gmra.mrb[0].mxu0 %v332
  %v499 = vpop.f32.mrb[0].mxu0
  %v500 = vadd.f32 %v421, %v499
  %v501 = vpop.f32.mrb[0].mxu0
  %502 = vmatprep.mubr.f32.mxu0 0.0
  %503 = vmatmul.mubr.f32.gmra.mrb[0].mxu0 %v337
  %v504 = vpop.f32.mrb[0].mxu0
  %v505 = vadd.f32 %v421, %v504
  %v506 = vpop.f32.mrb[0].mxu0
  %507 = vmatprep.mubr.f32.mxu0 0.0
  %508 = vmatmul.mubr.f32.gmra.mrb[0].mxu0 %v342
  %v509 = vpop.f32.mrb[0].mxu0
  %v510 = vadd.f32 %v421, %v509
  %v511 = vpop.f32.mrb[0].mxu0
  %512 = vmatprep.mubr.f32.mxu0 0.0
  %513 = vmatmul.mubr.f32.gmra.mrb[0].mxu0 %v347
  %v514 = vpop.f32.mrb[0].mxu0
  %v515 = vadd.f32 %v421, %v514
  %v516 = vpop.f32.mrb[0].mxu0
  %517 = vmatprep.mubr.f32.mxu0 0.0
  %518 = vmatmul.mubr.f32.gmra.mrb[0].mxu0 %v352
  %v519 = vpop.f32.mrb[0].mxu0
  %v520 = vadd.f32 %v421, %v519
  %v521 = vpop.f32.mrb[0].mxu0
  %522 = vmatprep.mubr.f32.mxu0 0.0
  %523 = vmatmul.mubr.f32.gmra.mrb[0].mxu0 %v357
  %v524 = vpop.f32.mrb[0].mxu0
  %v525 = vadd.f32 %v421, %v524
  %v526 = vpop.f32.mrb[0].mxu0
  %527 = vmatprep.mubr.f32.mxu0 0.0
  %528 = vmatmul.mubr.f32.gmra.mrb[0].mxu0 %v362
  %v529 = vpop.f32.mrb[0].mxu0
  %v530 = vadd.f32 %v421, %v529
  %v531 = vpop.f32.mrb[0].mxu0
  %532 = vmatprep.mubr.f32.mxu0 0.0
  %533 = vmatmul.mubr.f32.gmra.mrb[0].mxu0 %v367
  %v534 = vpop.f32.mrb[0].mxu0
  %v535 = vadd.f32 %v421, %v534
  %v536 = vpop.f32.mrb[0].mxu0
  %537 = vmatprep.mubr.f32.mxu0 0.0
  %538 = vmatmul.mubr.f32.gmra.mrb[0].mxu0 %v372
  %v539 = vpop.f32.mrb[0].mxu0
  %v540 = vadd.f32 %v421, %v539
  %v541 = vpop.f32.mrb[0].mxu0
  %542 = vmatprep.mubr.f32.mxu0 0.0
  %543 = vmatmul.mubr.f32.gmra.mrb[0].mxu0 %v377
  %v544 = vpop.f32.mrb[0].mxu0
  %v545 = vadd.f32 %v421, %v544
  %v546 = vpop.f32.mrb[0].mxu0
  %547 = vmatprep.mubr.f32.mxu0 0.0
  %548 = vmatmul.mubr.f32.gmra.mrb[0].mxu0 %v382
  %v549 = vpop.f32.mrb[0].mxu0
  %v550 = vadd.f32 %v421, %v549
  %v551 = vpop.f32.mrb[0].mxu0
  %552 = vmatprep.mubr.f32.mxu0 0.0
  %553 = vmatmul.mubr.f32.gmra.mrb[0].mxu0 %v387
  %v554 = vpop.f32.mrb[0].mxu0
  %v555 = vadd.f32 %v421, %v554
  %v556 = vpop.f32.mrb[0].mxu0
  %557 = vmatprep.mubr.f32.mxu0 0.0
  %558 = vmatmul.mubr.f32.gmra.mrb[0].mxu0 %v392
  %v559 = vpop.f32.mrb[0].mxu0
  %v560 = vadd.f32 %v421, %v559
  %v561 = vpop.f32.mrb[0].mxu0
  %562 = vmatprep.mubr.f32.mxu0 0.0
  %563 = vmatmul.mubr.f32.gmra.mrb[0].mxu0 %v397
  %v564 = vpop.f32.mrb[0].mxu0
  %v565 = vadd.f32 %v421, %v564
  %v566 = vpop.f32.mrb[0].mxu0
  %567 = vdwg.mxu0
  %v568 = vlaneseq
  %v569 = vand.u32 %v568, 127
  %vm570 = vcmp.lt.s32.totalorder %v569, 8
  %v571 = vsel %vm570, %v490, -1e+30
  %v572 = vsel %vm570, %v495, -1e+30
  %v573 = vsel %vm570, %v500, -1e+30
  %v574 = vsel %vm570, %v505, -1e+30
  %v575 = vsel %vm570, %v510, -1e+30
  %v576 = vsel %vm570, %v515, -1e+30
  %v577 = vsel %vm570, %v520, -1e+30
  %v578 = vsel %vm570, %v525, -1e+30
  %v579 = vsel %vm570, %v530, -1e+30
  %v580 = vsel %vm570, %v535, -1e+30
  %v581 = vsel %vm570, %v540, -1e+30
  %v582 = vsel %vm570, %v545, -1e+30
  %v583 = vsel %vm570, %v550, -1e+30
  %v584 = vsel %vm570, %v555, -1e+30
  %v585 = vsel %vm570, %v560, -1e+30
  %v586 = vsel %vm570, %v565, -1e+30
  %587 = vmax.xlane.f32.xlu0 %v571
  %v588 = vpop.xlane.xlu0 %587
  %589 = vmax.xlane.f32.xlu0 %v572
  %v590 = vpop.xlane.xlu0 %589
  %591 = vmax.xlane.f32.xlu0 %v573
  %v592 = vpop.xlane.xlu0 %591
  %593 = vmax.xlane.f32.xlu0 %v574
  %v594 = vpop.xlane.xlu0 %593
  %595 = vmax.xlane.f32.xlu0 %v575
  %v596 = vpop.xlane.xlu0 %595
  %597 = vmax.xlane.f32.xlu0 %v576
  %v598 = vpop.xlane.xlu0 %597
  %599 = vmax.xlane.f32.xlu0 %v577
  %v600 = vpop.xlane.xlu0 %599
  %601 = vmax.xlane.f32.xlu0 %v578
  %v602 = vpop.xlane.xlu0 %601
  %603 = vmax.xlane.f32.xlu0 %v579
  %v604 = vpop.xlane.xlu0 %603
  %605 = vmax.xlane.f32.xlu0 %v580
  %v606 = vpop.xlane.xlu0 %605
  %607 = vmax.xlane.f32.xlu0 %v581
  %v608 = vpop.xlane.xlu0 %607
  %609 = vmax.xlane.f32.xlu0 %v582
  %v610 = vpop.xlane.xlu0 %609
  %611 = vmax.xlane.f32.xlu0 %v583
  %v612 = vpop.xlane.xlu0 %611
  %613 = vmax.xlane.f32.xlu0 %v584
  %v614 = vpop.xlane.xlu0 %613
  %615 = vmax.xlane.f32.xlu0 %v585
  %v616 = vpop.xlane.xlu0 %615
  %617 = vmax.xlane.f32.xlu0 %v586
  %v618 = vpop.xlane.xlu0 %617
  %v619 = vsub.f32 %v571, %v588
  %v620 = vsub.f32 %v572, %v590
  %v621 = vsub.f32 %v573, %v592
  %v622 = vsub.f32 %v574, %v594
  %v623 = vsub.f32 %v575, %v596
  %v624 = vsub.f32 %v576, %v598
  %v625 = vsub.f32 %v577, %v600
  %v626 = vsub.f32 %v578, %v602
  %v627 = vsub.f32 %v579, %v604
  %v628 = vsub.f32 %v580, %v606
  %v629 = vsub.f32 %v581, %v608
  %v630 = vsub.f32 %v582, %v610
  %v631 = vsub.f32 %v583, %v612
  %v632 = vsub.f32 %v584, %v614
  %v633 = vsub.f32 %v585, %v616
  %v634 = vsub.f32 %v586, %v618
  %v635 = vmul.f32 %v619, 1.442695
  %v636 = vpow.pop %v635
  %v637 = vmul.f32 %v620, 1.442695
  %v638 = vpow.pop %v637
  %v639 = vmul.f32 %v621, 1.442695
  %v640 = vpow.pop %v639
  %v641 = vmul.f32 %v622, 1.442695
  %v642 = vpow.pop %v641
  %v643 = vmul.f32 %v623, 1.442695
  %v644 = vpow.pop %v643
  %v645 = vmul.f32 %v624, 1.442695
  %v646 = vpow.pop %v645
  %v647 = vmul.f32 %v625, 1.442695
  %v648 = vpow.pop %v647
  %v649 = vmul.f32 %v626, 1.442695
  %v650 = vpow.pop %v649
  %v651 = vmul.f32 %v627, 1.442695
  %v652 = vpow.pop %v651
  %v653 = vmul.f32 %v628, 1.442695
  %v654 = vpow.pop %v653
  %v655 = vmul.f32 %v629, 1.442695
  %v656 = vpow.pop %v655
  %v657 = vmul.f32 %v630, 1.442695
  %v658 = vpow.pop %v657
  %v659 = vmul.f32 %v631, 1.442695
  %v660 = vpow.pop %v659
  %v661 = vmul.f32 %v632, 1.442695
  %v662 = vpow.pop %v661
  %v663 = vmul.f32 %v633, 1.442695
  %v664 = vpow.pop %v663
  %v665 = vmul.f32 %v634, 1.442695
  %v666 = vpow.pop %v665
  %v667 = vsel %vm570, %v636, 0.0
  %v668 = vsel %vm570, %v638, 0.0
  %v669 = vsel %vm570, %v640, 0.0
  %v670 = vsel %vm570, %v642, 0.0
  %v671 = vsel %vm570, %v644, 0.0
  %v672 = vsel %vm570, %v646, 0.0
  %v673 = vsel %vm570, %v648, 0.0
  %v674 = vsel %vm570, %v650, 0.0
  %v675 = vsel %vm570, %v652, 0.0
  %v676 = vsel %vm570, %v654, 0.0
  %v677 = vsel %vm570, %v656, 0.0
  %v678 = vsel %vm570, %v658, 0.0
  %v679 = vsel %vm570, %v660, 0.0
  %v680 = vsel %vm570, %v662, 0.0
  %v681 = vsel %vm570, %v664, 0.0
  %v682 = vsel %vm570, %v666, 0.0
  %683 = vadd.xlane.f32.xlu0 %v667
  %v684 = vpop.xlane.xlu0 %683
  %685 = vadd.xlane.f32.xlu0 %v668
  %v686 = vpop.xlane.xlu0 %685
  %687 = vadd.xlane.f32.xlu0 %v669
  %v688 = vpop.xlane.xlu0 %687
  %689 = vadd.xlane.f32.xlu0 %v670
  %v690 = vpop.xlane.xlu0 %689
  %691 = vadd.xlane.f32.xlu0 %v671
  %v692 = vpop.xlane.xlu0 %691
  %693 = vadd.xlane.f32.xlu0 %v672
  %v694 = vpop.xlane.xlu0 %693
  %695 = vadd.xlane.f32.xlu0 %v673
  %v696 = vpop.xlane.xlu0 %695
  %697 = vadd.xlane.f32.xlu0 %v674
  %v698 = vpop.xlane.xlu0 %697
  %699 = vadd.xlane.f32.xlu0 %v675
  %v700 = vpop.xlane.xlu0 %699
  %701 = vadd.xlane.f32.xlu0 %v676
  %v702 = vpop.xlane.xlu0 %701
  %703 = vadd.xlane.f32.xlu0 %v677
  %v704 = vpop.xlane.xlu0 %703
  %705 = vadd.xlane.f32.xlu0 %v678
  %v706 = vpop.xlane.xlu0 %705
  %707 = vadd.xlane.f32.xlu0 %v679
  %v708 = vpop.xlane.xlu0 %707
  %709 = vadd.xlane.f32.xlu0 %v680
  %v710 = vpop.xlane.xlu0 %709
  %711 = vadd.xlane.f32.xlu0 %v681
  %v712 = vpop.xlane.xlu0 %711
  %713 = vadd.xlane.f32.xlu0 %v682
  %v714 = vpop.xlane.xlu0 %713
  %v715 = vlog2.pop %v684
  %v716 = vmul.f32 %v715, 0.6931472
  %v717 = vlog2.pop %v686
  %v718 = vmul.f32 %v717, 0.6931472
  %v719 = vlog2.pop %v688
  %v720 = vmul.f32 %v719, 0.6931472
  %v721 = vlog2.pop %v690
  %v722 = vmul.f32 %v721, 0.6931472
  %v723 = vlog2.pop %v692
  %v724 = vmul.f32 %v723, 0.6931472
  %v725 = vlog2.pop %v694
  %v726 = vmul.f32 %v725, 0.6931472
  %v727 = vlog2.pop %v696
  %v728 = vmul.f32 %v727, 0.6931472
  %v729 = vlog2.pop %v698
  %v730 = vmul.f32 %v729, 0.6931472
  %v731 = vlog2.pop %v700
  %v732 = vmul.f32 %v731, 0.6931472
  %v733 = vlog2.pop %v702
  %v734 = vmul.f32 %v733, 0.6931472
  %v735 = vlog2.pop %v704
  %v736 = vmul.f32 %v735, 0.6931472
  %v737 = vlog2.pop %v706
  %v738 = vmul.f32 %v737, 0.6931472
  %v739 = vlog2.pop %v708
  %v740 = vmul.f32 %v739, 0.6931472
  %v741 = vlog2.pop %v710
  %v742 = vmul.f32 %v741, 0.6931472
  %v743 = vlog2.pop %v712
  %v744 = vmul.f32 %v743, 0.6931472
  %v745 = vlog2.pop %v714
  %v746 = vmul.f32 %v745, 0.6931472
  %v747 = vsub.f32 %v619, %v716
  %v748 = vsub.f32 %v620, %v718
  %v749 = vsub.f32 %v621, %v720
  %v750 = vsub.f32 %v622, %v722
  %v751 = vsub.f32 %v623, %v724
  %v752 = vsub.f32 %v624, %v726
  %v753 = vsub.f32 %v625, %v728
  %v754 = vsub.f32 %v626, %v730
  %v755 = vsub.f32 %v627, %v732
  %v756 = vsub.f32 %v628, %v734
  %v757 = vsub.f32 %v629, %v736
  %v758 = vsub.f32 %v630, %v738
  %v759 = vsub.f32 %v631, %v740
  %v760 = vsub.f32 %v632, %v742
  %v761 = vsub.f32 %v633, %v744
  %v762 = vsub.f32 %v634, %v746
  %763 = vst [vmem:[%s6] sm:$0xff] %v747
  %764 = vst [vmem:[%s6 + $0x8] sm:$0xff] %v748
  %765 = vst [vmem:[%s6 + $0x10] sm:$0xff] %v749
  %766 = vst [vmem:[%s6 + $0x18] sm:$0xff] %v750
  %767 = vst [vmem:[%s6 + $0x20] sm:$0xff] %v751
  %768 = vst [vmem:[%s6 + $0x28] sm:$0xff] %v752
  %769 = vst [vmem:[%s6 + $0x30] sm:$0xff] %v753
  %770 = vst [vmem:[%s6 + $0x38] sm:$0xff] %v754
  %771 = vst [vmem:[%s6 + $0x40] sm:$0xff] %v755
  %772 = vst [vmem:[%s6 + $0x48] sm:$0xff] %v756
  %773 = vst [vmem:[%s6 + $0x50] sm:$0xff] %v757
  %774 = vst [vmem:[%s6 + $0x58] sm:$0xff] %v758
  %775 = vst [vmem:[%s6 + $0x60] sm:$0xff] %v759
  %776 = vst [vmem:[%s6 + $0x68] sm:$0xff] %v760
  %777 = vst [vmem:[%s6 + $0x70] sm:$0xff] %v761
  %778 = vst [vmem:[%s6 + $0x78] sm:$0xff] %v762
  // Predicated region
  $region26: #{_gclip_forward.21} parent=0 // pred_check
    _
  $region27: #{_gclip_forward.21} parent=0 // pred_check_branch
    %780 = sbr.rel (0) target = $region29
  $region28: #{_gclip_forward.21} parent=0 // pred_region
    _
  $region29: #{_gclip_forward.21} parent=0 // pred_fallthru
    _
  // Predicated region
  $region30: #{_gclip_forward.21} parent=0 // pred_check
    _
  $region31: #{_gclip_forward.21} parent=0 // pred_check_branch
    %782 = sbr.rel (0) target = $region33
  $region32: #{_gclip_forward.21} parent=0 // pred_region
    _
  $region33: #{_gclip_forward.21} parent=0 // pred_fallthru
    _

</llo_original>
